<compile_context>
chip_gen: v6e
topology: v6e:2x2x1
jax: 0.10.0
libtpu: 0.0.40
codegen_flags: <defaults>
</compile_context>

<pallas_src>
import jax
import jax.numpy as jnp
from jax.experimental import pallas as pl
from jax.experimental.pallas import tpu as pltpu

SUBLANE = 8  # f32 sublane count; batch is padded to this for aligned slices.


def lstm_kernel(x_ref, h0_ref, c0_ref, wih_ref, whh_ref, b_ref,
                wfc_ref, bfc_ref,
                out_ref, hn_ref, cn_ref):
    TB = x_ref.shape[0]
    B, H = h0_ref.shape          # B is the padded batch (multiple of 8)
    T = TB // B

    # ---- Phase 0: input projection for ALL time steps (no serial dependence) ----
    # (T*B, I) @ (I, 4H) + (1, 4H) -> (T*B, 4H)
    gates_x = (jnp.dot(x_ref[...], wih_ref[...],
                       preferred_element_type=jnp.float32)
               + b_ref[...])

    whh = whh_ref[...]
    h = h0_ref[...].astype(jnp.float32)
    c = c0_ref[...].astype(jnp.float32)

    # ---- Phase 1: serial recurrence, fully unrolled (T static at trace time) ----
    hs = []
    for t in range(T):
        # Static, sublane-aligned slice (B is a multiple of 8).
        gates = gates_x[t * B:(t + 1) * B, :] + jnp.dot(
            h, whh, preferred_element_type=jnp.float32)        # (B, 4H)

        # Full 4H-lane-wide nonlinearities, then static slices ([i, f, g, o]).
        sg = jax.nn.sigmoid(gates)
        th = jnp.tanh(gates)
        i_g = sg[:, 0 * H:1 * H]
        f_g = sg[:, 1 * H:2 * H]
        g_g = th[:, 2 * H:3 * H]
        o_g = sg[:, 3 * H:4 * H]

        c = f_g * c + i_g * g_g
        h = o_g * jnp.tanh(c)
        hs.append(h)              # keep h_t in registers for the deferred fc

    # Final states written exactly once.
    hn_ref[...] = h.astype(hn_ref.dtype)
    cn_ref[...] = c.astype(cn_ref.dtype)

    # ---- Phase 2: deferred fc over all steps: one matmul, one dense writeback ----
    h_all = jnp.concatenate(hs, axis=0)                        # (T*B, H)
    out_ref[...] = (jnp.dot(h_all, wfc_ref[...],
                            preferred_element_type=jnp.float32)
                    + bfc_ref[...]).astype(out_ref.dtype)


def lstm_forward(x, h0, c0, w_ih_t, w_hh_t, b, w_fc_t, b_fc):
    """LSTM + Linear fully inside a single Pallas kernel invocation.

    w_ih_t : (I, 4H)   = PyTorch weight_ih_l0.T
    w_hh_t : (H, 4H)   = PyTorch weight_hh_l0.T
    b      : (1, 4H)   = bias_ih_l0 + bias_hh_l0
    w_fc_t : (H, C)    = fc.weight.T
    b_fc   : (1, C)    = fc.bias
    """
    T, B, I = x.shape
    H = h0.shape[-1]
    C = w_fc_t.shape[-1]

    # Pad batch (sublane dim) up to a multiple of 8 with zero rows so every
    # per-step slice / store inside the kernel is (8,*)-aligned.  LSTM rows are
    # independent, so pad rows never affect the real ones.
    Bp = ((B + SUBLANE - 1) // SUBLANE) * SUBLANE
    pad = Bp - B
    if pad:
        x_p = jnp.pad(x, ((0, 0), (0, pad), (0, 0)))
        h0_p = jnp.pad(h0[0], ((0, pad), (0, 0)))
        c0_p = jnp.pad(c0[0], ((0, pad), (0, 0)))
    else:
        x_p, h0_p, c0_p = x, h0[0], c0[0]

    # Cheap wrapper-side layout ops so the kernel works purely in 2D.
    x2d = x_p.reshape(T * Bp, I)

    out2d, hn, cn = pl.pallas_call(
        lstm_kernel,
        out_shape=(jax.ShapeDtypeStruct((T * Bp, C), x.dtype),
                   jax.ShapeDtypeStruct((Bp, H), x.dtype),
                   jax.ShapeDtypeStruct((Bp, H), x.dtype)),
        grid_spec=pltpu.PrefetchScalarGridSpec(
            num_scalar_prefetch=0,
            grid=(1,),                                        # single invocation
            in_specs=[
                pl.BlockSpec((T * Bp, I), lambda i: (0, 0)),   # x (flattened)
                pl.BlockSpec((Bp, H), lambda i: (0, 0)),       # h0
                pl.BlockSpec((Bp, H), lambda i: (0, 0)),       # c0
                pl.BlockSpec((I, 4 * H), lambda i: (0, 0)),    # W_ih^T
                pl.BlockSpec((H, 4 * H), lambda i: (0, 0)),    # W_hh^T
                pl.BlockSpec((1, 4 * H), lambda i: (0, 0)),    # bias (ih+hh)
                pl.BlockSpec((H, C), lambda i: (0, 0)),        # W_fc^T
                pl.BlockSpec((1, C), lambda i: (0, 0)),        # b_fc
            ],
            out_specs=[
                pl.BlockSpec((T * Bp, C), lambda i: (0, 0)),   # outputs (flattened)
                pl.BlockSpec((Bp, H), lambda i: (0, 0)),       # h_n
                pl.BlockSpec((Bp, H), lambda i: (0, 0)),       # c_n
            ],
        ),
        compiler_params=pltpu.CompilerParams(
            dimension_semantics=("arbitrary",)),
    )(x2d, h0_p, c0_p, w_ih_t, w_hh_t, b, w_fc_t, b_fc)

    out = out2d.reshape(T, Bp, C)[:, :B, :]
    return out, hn[None, :B, :], cn[None, :B, :]


def lstm_ref(x, h0, c0, w_ih_t, w_hh_t, b, w_fc_t, b_fc):
    """Pure-JAX reference (PyTorch LSTM semantics) for correctness check."""
    H = h0.shape[-1]

    def step(carry, xt):
        h, c = carry
        gates = xt @ w_ih_t + h @ w_hh_t + b
        i = jax.nn.sigmoid(gates[:, 0 * H:1 * H])
        f = jax.nn.sigmoid(gates[:, 1 * H:2 * H])
        g = jnp.tanh(gates[:, 2 * H:3 * H])
        o = jax.nn.sigmoid(gates[:, 3 * H:4 * H])
        c = f * c + i * g
        h = o * jnp.tanh(c)
        return (h, c), h @ w_fc_t + b_fc

    (hn, cn), out = jax.lax.scan(step, (h0[0], c0[0]), x)
    return out, hn[None], cn[None]


if __name__ == "__main__":
    # Small shapes consistent with the module's forward.
    SEQ, BATCH = 8, 2
    NUM_CATEGORIES = 16       # input size == output size of fc
    HIDDEN = 32               # 4H = 128 -> one full lane width across the gates
    NUM_LAYERS = 1

    key = jax.random.PRNGKey(0)
    ks = jax.random.split(key, 8)
    scale = 1.0 / jnp.sqrt(HIDDEN)

    x = jax.random.normal(ks[0], (SEQ, BATCH, NUM_CATEGORIES), jnp.float32)
    h0 = jax.random.normal(ks[1], (NUM_LAYERS, BATCH, HIDDEN), jnp.float32)
    c0 = jax.random.normal(ks[2], (NUM_LAYERS, BATCH, HIDDEN), jnp.float32)

    # Deterministic parameter init (shapes match nn.LSTM / nn.Linear).
    # PyTorch stores weight_ih: (4H, I); we pre-transpose for x @ W^T.
    w_ih_t = jax.random.uniform(ks[3], (NUM_CATEGORIES, 4 * HIDDEN),
                                jnp.float32, -scale, scale)
    w_hh_t = jax.random.uniform(ks[4], (HIDDEN, 4 * HIDDEN),
                                jnp.float32, -scale, scale)
    b = jax.random.uniform(ks[5], (1, 4 * HIDDEN), jnp.float32,
                           -scale, scale)                      # b_ih + b_hh combined
    w_fc_t = jax.random.uniform(ks[6], (HIDDEN, NUM_CATEGORIES),
                                jnp.float32, -scale, scale)
    b_fc = jax.random.uniform(ks[7], (1, NUM_CATEGORIES), jnp.float32,
                              -scale, scale)

    out, hn, cn = lstm_forward(x, h0, c0, w_ih_t, w_hh_t, b, w_fc_t, b_fc)
    jax.block_until_ready((out, hn, cn))

    out_r, hn_r, cn_r = lstm_ref(x, h0, c0, w_ih_t, w_hh_t, b, w_fc_t, b_fc)
    assert out.shape == (SEQ, BATCH, NUM_CATEGORIES)
    assert hn.shape == (NUM_LAYERS, BATCH, HIDDEN)
    assert cn.shape == (NUM_LAYERS, BATCH, HIDDEN)
    assert jnp.allclose(out, out_r, atol=1e-5, rtol=1e-5)
    assert jnp.allclose(hn, hn_r, atol=1e-5, rtol=1e-5)
    assert jnp.allclose(cn, cn_r, atol=1e-5, rtol=1e-5)

    print("KERNEL_OK")
</pallas_src>

<mosaic_0001>
module attributes {stable_mosaic.version = 11 : i64} {
  func.func @lstm_kernel(%arg0: i32, %arg1: memref<64x16xf32, #tpu.memory_space<vmem>>, %arg2: memref<8x32xf32, #tpu.memory_space<vmem>>, %arg3: memref<8x32xf32, #tpu.memory_space<vmem>>, %arg4: memref<16x128xf32, #tpu.memory_space<vmem>>, %arg5: memref<32x128xf32, #tpu.memory_space<vmem>>, %arg6: memref<1x128xf32, #tpu.memory_space<vmem>>, %arg7: memref<32x16xf32, #tpu.memory_space<vmem>>, %arg8: memref<1x16xf32, #tpu.memory_space<vmem>>, %arg9: memref<64x16xf32, #tpu.memory_space<vmem>>, %arg10: memref<8x32xf32, #tpu.memory_space<vmem>>, %arg11: memref<8x32xf32, #tpu.memory_space<vmem>>) attributes {dimension_semantics = [#tpu.dimension_semantics<arbitrary>], iteration_bounds = array<i64: 1>, scalar_prefetch = 0 : i64, scratch_operands = 0 : i64, tpu.core_type = #tpu.core_type<tc>, window_params = [{pipeline_mode = #tpu.pipeline_mode<synchronous>, transform_indices = @transform_0, window_bounds = array<i64: 64, 16>}, {pipeline_mode = #tpu.pipeline_mode<synchronous>, transform_indices = @transform_1, window_bounds = array<i64: 8, 32>}, {pipeline_mode = #tpu.pipeline_mode<synchronous>, transform_indices = @transform_2, window_bounds = array<i64: 8, 32>}, {pipeline_mode = #tpu.pipeline_mode<synchronous>, transform_indices = @transform_3, window_bounds = array<i64: 16, 128>}, {pipeline_mode = #tpu.pipeline_mode<synchronous>, transform_indices = @transform_4, window_bounds = array<i64: 32, 128>}, {pipeline_mode = #tpu.pipeline_mode<synchronous>, transform_indices = @transform_5, window_bounds = array<i64: 1, 128>}, {pipeline_mode = #tpu.pipeline_mode<synchronous>, transform_indices = @transform_6, window_bounds = array<i64: 32, 16>}, {pipeline_mode = #tpu.pipeline_mode<synchronous>, transform_indices = @transform_7, window_bounds = array<i64: 1, 16>}, {pipeline_mode = #tpu.pipeline_mode<synchronous>, transform_indices = @transform_8, window_bounds = array<i64: 64, 16>}, {pipeline_mode = #tpu.pipeline_mode<synchronous>, transform_indices = @transform_9, window_bounds = array<i64: 8, 32>}, {pipeline_mode = #tpu.pipeline_mode<synchronous>, transform_indices = @transform_10, window_bounds = array<i64: 8, 32>}]} {
    %c0 = arith.constant 0 : index
    %c0_0 = arith.constant 0 : index
    %0 = vector.load %arg1[%c0, %c0_0] : memref<64x16xf32, #tpu.memory_space<vmem>>, vector<64x16xf32>
    %c0_1 = arith.constant 0 : index
    %c0_2 = arith.constant 0 : index
    %1 = vector.load %arg4[%c0_1, %c0_2] : memref<16x128xf32, #tpu.memory_space<vmem>>, vector<16x128xf32>
    %cst = arith.constant dense<0.000000e+00> : vector<64x128xf32>
    %2 = tpu.matmul %0, %1, %cst {dimension_numbers = #tpu.dot_dimension_numbers<[1], [0], [0], [1], [0, 0, 1, 1], [], []>} : vector<64x16xf32>, vector<16x128xf32>, vector<64x128xf32> -> vector<64x128xf32>
    %c0_3 = arith.constant 0 : index
    %c0_4 = arith.constant 0 : index
    %3 = vector.load %arg6[%c0_3, %c0_4] : memref<1x128xf32, #tpu.memory_space<vmem>>, vector<1x128xf32>
    %4 = vector.broadcast %3 : vector<1x128xf32> to vector<64x128xf32>
    %5 = arith.addf %2, %4 : vector<64x128xf32>
    %c0_5 = arith.constant 0 : index
    %c0_6 = arith.constant 0 : index
    %6 = vector.load %arg5[%c0_5, %c0_6] : memref<32x128xf32, #tpu.memory_space<vmem>>, vector<32x128xf32>
    %c0_7 = arith.constant 0 : index
    %c0_8 = arith.constant 0 : index
    %7 = vector.load %arg2[%c0_7, %c0_8] : memref<8x32xf32, #tpu.memory_space<vmem>>, vector<8x32xf32>
    %c0_9 = arith.constant 0 : index
    %c0_10 = arith.constant 0 : index
    %8 = vector.load %arg3[%c0_9, %c0_10] : memref<8x32xf32, #tpu.memory_space<vmem>>, vector<8x32xf32>
    %9 = vector.extract_strided_slice %5 {offsets = [0, 0], sizes = [8, 128], strides = [1, 1]} : vector<64x128xf32> to vector<8x128xf32>
    %cst_11 = arith.constant dense<0.000000e+00> : vector<8x128xf32>
    %10 = tpu.matmul %7, %6, %cst_11 {dimension_numbers = #tpu.dot_dimension_numbers<[1], [0], [0], [1], [0, 0, 1, 1], [], []>} : vector<8x32xf32>, vector<32x128xf32>, vector<8x128xf32> -> vector<8x128xf32>
    %11 = arith.addf %9, %10 : vector<8x128xf32>
    %12 = arith.negf %11 : vector<8x128xf32>
    %13 = math.exp %12 : vector<8x128xf32>
    %cst_12 = arith.constant 1.000000e+00 : f32
    %14 = vector.broadcast %cst_12 : f32 to vector<8x128xf32>
    %15 = arith.addf %14, %13 : vector<8x128xf32>
    %16 = arith.divf %14, %15 : vector<8x128xf32>
    %17 = math.tanh %11 : vector<8x128xf32>
    %18 = vector.extract_strided_slice %16 {offsets = [0, 0], sizes = [8, 32], strides = [1, 1]} : vector<8x128xf32> to vector<8x32xf32>
    %19 = vector.extract_strided_slice %16 {offsets = [0, 32], sizes = [8, 32], strides = [1, 1]} : vector<8x128xf32> to vector<8x32xf32>
    %20 = vector.extract_strided_slice %17 {offsets = [0, 64], sizes = [8, 32], strides = [1, 1]} : vector<8x128xf32> to vector<8x32xf32>
    %21 = vector.extract_strided_slice %16 {offsets = [0, 96], sizes = [8, 32], strides = [1, 1]} : vector<8x128xf32> to vector<8x32xf32>
    %22 = arith.mulf %19, %8 : vector<8x32xf32>
    %23 = arith.mulf %18, %20 : vector<8x32xf32>
    %24 = arith.addf %22, %23 : vector<8x32xf32>
    %25 = math.tanh %24 : vector<8x32xf32>
    %26 = arith.mulf %21, %25 : vector<8x32xf32>
    %27 = vector.extract_strided_slice %5 {offsets = [8, 0], sizes = [8, 128], strides = [1, 1]} : vector<64x128xf32> to vector<8x128xf32>
    %cst_13 = arith.constant dense<0.000000e+00> : vector<8x128xf32>
    %28 = tpu.matmul %26, %6, %cst_13 {dimension_numbers = #tpu.dot_dimension_numbers<[1], [0], [0], [1], [0, 0, 1, 1], [], []>} : vector<8x32xf32>, vector<32x128xf32>, vector<8x128xf32> -> vector<8x128xf32>
    %29 = arith.addf %27, %28 : vector<8x128xf32>
    %30 = arith.negf %29 : vector<8x128xf32>
    %31 = math.exp %30 : vector<8x128xf32>
    %cst_14 = arith.constant 1.000000e+00 : f32
    %32 = vector.broadcast %cst_14 : f32 to vector<8x128xf32>
    %33 = arith.addf %32, %31 : vector<8x128xf32>
    %34 = arith.divf %32, %33 : vector<8x128xf32>
    %35 = math.tanh %29 : vector<8x128xf32>
    %36 = vector.extract_strided_slice %34 {offsets = [0, 0], sizes = [8, 32], strides = [1, 1]} : vector<8x128xf32> to vector<8x32xf32>
    %37 = vector.extract_strided_slice %34 {offsets = [0, 32], sizes = [8, 32], strides = [1, 1]} : vector<8x128xf32> to vector<8x32xf32>
    %38 = vector.extract_strided_slice %35 {offsets = [0, 64], sizes = [8, 32], strides = [1, 1]} : vector<8x128xf32> to vector<8x32xf32>
    %39 = vector.extract_strided_slice %34 {offsets = [0, 96], sizes = [8, 32], strides = [1, 1]} : vector<8x128xf32> to vector<8x32xf32>
    %40 = arith.mulf %37, %24 : vector<8x32xf32>
    %41 = arith.mulf %36, %38 : vector<8x32xf32>
    %42 = arith.addf %40, %41 : vector<8x32xf32>
    %43 = math.tanh %42 : vector<8x32xf32>
    %44 = arith.mulf %39, %43 : vector<8x32xf32>
    %45 = vector.extract_strided_slice %5 {offsets = [16, 0], sizes = [8, 128], strides = [1, 1]} : vector<64x128xf32> to vector<8x128xf32>
    %cst_15 = arith.constant dense<0.000000e+00> : vector<8x128xf32>
    %46 = tpu.matmul %44, %6, %cst_15 {dimension_numbers = #tpu.dot_dimension_numbers<[1], [0], [0], [1], [0, 0, 1, 1], [], []>} : vector<8x32xf32>, vector<32x128xf32>, vector<8x128xf32> -> vector<8x128xf32>
    %47 = arith.addf %45, %46 : vector<8x128xf32>
    %48 = arith.negf %47 : vector<8x128xf32>
    %49 = math.exp %48 : vector<8x128xf32>
    %cst_16 = arith.constant 1.000000e+00 : f32
    %50 = vector.broadcast %cst_16 : f32 to vector<8x128xf32>
    %51 = arith.addf %50, %49 : vector<8x128xf32>
    %52 = arith.divf %50, %51 : vector<8x128xf32>
    %53 = math.tanh %47 : vector<8x128xf32>
    %54 = vector.extract_strided_slice %52 {offsets = [0, 0], sizes = [8, 32], strides = [1, 1]} : vector<8x128xf32> to vector<8x32xf32>
    %55 = vector.extract_strided_slice %52 {offsets = [0, 32], sizes = [8, 32], strides = [1, 1]} : vector<8x128xf32> to vector<8x32xf32>
    %56 = vector.extract_strided_slice %53 {offsets = [0, 64], sizes = [8, 32], strides = [1, 1]} : vector<8x128xf32> to vector<8x32xf32>
    %57 = vector.extract_strided_slice %52 {offsets = [0, 96], sizes = [8, 32], strides = [1, 1]} : vector<8x128xf32> to vector<8x32xf32>
    %58 = arith.mulf %55, %42 : vector<8x32xf32>
    %59 = arith.mulf %54, %56 : vector<8x32xf32>
    %60 = arith.addf %58, %59 : vector<8x32xf32>
    %61 = math.tanh %60 : vector<8x32xf32>
    %62 = arith.mulf %57, %61 : vector<8x32xf32>
    %63 = vector.extract_strided_slice %5 {offsets = [24, 0], sizes = [8, 128], strides = [1, 1]} : vector<64x128xf32> to vector<8x128xf32>
    %cst_17 = arith.constant dense<0.000000e+00> : vector<8x128xf32>
    %64 = tpu.matmul %62, %6, %cst_17 {dimension_numbers = #tpu.dot_dimension_numbers<[1], [0], [0], [1], [0, 0, 1, 1], [], []>} : vector<8x32xf32>, vector<32x128xf32>, vector<8x128xf32> -> vector<8x128xf32>
    %65 = arith.addf %63, %64 : vector<8x128xf32>
    %66 = arith.negf %65 : vector<8x128xf32>
    %67 = math.exp %66 : vector<8x128xf32>
    %cst_18 = arith.constant 1.000000e+00 : f32
    %68 = vector.broadcast %cst_18 : f32 to vector<8x128xf32>
    %69 = arith.addf %68, %67 : vector<8x128xf32>
    %70 = arith.divf %68, %69 : vector<8x128xf32>
    %71 = math.tanh %65 : vector<8x128xf32>
    %72 = vector.extract_strided_slice %70 {offsets = [0, 0], sizes = [8, 32], strides = [1, 1]} : vector<8x128xf32> to vector<8x32xf32>
    %73 = vector.extract_strided_slice %70 {offsets = [0, 32], sizes = [8, 32], strides = [1, 1]} : vector<8x128xf32> to vector<8x32xf32>
    %74 = vector.extract_strided_slice %71 {offsets = [0, 64], sizes = [8, 32], strides = [1, 1]} : vector<8x128xf32> to vector<8x32xf32>
    %75 = vector.extract_strided_slice %70 {offsets = [0, 96], sizes = [8, 32], strides = [1, 1]} : vector<8x128xf32> to vector<8x32xf32>
    %76 = arith.mulf %73, %60 : vector<8x32xf32>
    %77 = arith.mulf %72, %74 : vector<8x32xf32>
    %78 = arith.addf %76, %77 : vector<8x32xf32>
    %79 = math.tanh %78 : vector<8x32xf32>
    %80 = arith.mulf %75, %79 : vector<8x32xf32>
    %81 = vector.extract_strided_slice %5 {offsets = [32, 0], sizes = [8, 128], strides = [1, 1]} : vector<64x128xf32> to vector<8x128xf32>
    %cst_19 = arith.constant dense<0.000000e+00> : vector<8x128xf32>
    %82 = tpu.matmul %80, %6, %cst_19 {dimension_numbers = #tpu.dot_dimension_numbers<[1], [0], [0], [1], [0, 0, 1, 1], [], []>} : vector<8x32xf32>, vector<32x128xf32>, vector<8x128xf32> -> vector<8x128xf32>
    %83 = arith.addf %81, %82 : vector<8x128xf32>
    %84 = arith.negf %83 : vector<8x128xf32>
    %85 = math.exp %84 : vector<8x128xf32>
    %cst_20 = arith.constant 1.000000e+00 : f32
    %86 = vector.broadcast %cst_20 : f32 to vector<8x128xf32>
    %87 = arith.addf %86, %85 : vector<8x128xf32>
    %88 = arith.divf %86, %87 : vector<8x128xf32>
    %89 = math.tanh %83 : vector<8x128xf32>
    %90 = vector.extract_strided_slice %88 {offsets = [0, 0], sizes = [8, 32], strides = [1, 1]} : vector<8x128xf32> to vector<8x32xf32>
    %91 = vector.extract_strided_slice %88 {offsets = [0, 32], sizes = [8, 32], strides = [1, 1]} : vector<8x128xf32> to vector<8x32xf32>
    %92 = vector.extract_strided_slice %89 {offsets = [0, 64], sizes = [8, 32], strides = [1, 1]} : vector<8x128xf32> to vector<8x32xf32>
    %93 = vector.extract_strided_slice %88 {offsets = [0, 96], sizes = [8, 32], strides = [1, 1]} : vector<8x128xf32> to vector<8x32xf32>
    %94 = arith.mulf %91, %78 : vector<8x32xf32>
    %95 = arith.mulf %90, %92 : vector<8x32xf32>
    %96 = arith.addf %94, %95 : vector<8x32xf32>
    %97 = math.tanh %96 : vector<8x32xf32>
    %98 = arith.mulf %93, %97 : vector<8x32xf32>
    %99 = vector.extract_strided_slice %5 {offsets = [40, 0], sizes = [8, 128], strides = [1, 1]} : vector<64x128xf32> to vector<8x128xf32>
    %cst_21 = arith.constant dense<0.000000e+00> : vector<8x128xf32>
    %100 = tpu.matmul %98, %6, %cst_21 {dimension_numbers = #tpu.dot_dimension_numbers<[1], [0], [0], [1], [0, 0, 1, 1], [], []>} : vector<8x32xf32>, vector<32x128xf32>, vector<8x128xf32> -> vector<8x128xf32>
    %101 = arith.addf %99, %100 : vector<8x128xf32>
    %102 = arith.negf %101 : vector<8x128xf32>
    %103 = math.exp %102 : vector<8x128xf32>
    %cst_22 = arith.constant 1.000000e+00 : f32
    %104 = vector.broadcast %cst_22 : f32 to vector<8x128xf32>
    %105 = arith.addf %104, %103 : vector<8x128xf32>
    %106 = arith.divf %104, %105 : vector<8x128xf32>
    %107 = math.tanh %101 : vector<8x128xf32>
    %108 = vector.extract_strided_slice %106 {offsets = [0, 0], sizes = [8, 32], strides = [1, 1]} : vector<8x128xf32> to vector<8x32xf32>
    %109 = vector.extract_strided_slice %106 {offsets = [0, 32], sizes = [8, 32], strides = [1, 1]} : vector<8x128xf32> to vector<8x32xf32>
    %110 = vector.extract_strided_slice %107 {offsets = [0, 64], sizes = [8, 32], strides = [1, 1]} : vector<8x128xf32> to vector<8x32xf32>
    %111 = vector.extract_strided_slice %106 {offsets = [0, 96], sizes = [8, 32], strides = [1, 1]} : vector<8x128xf32> to vector<8x32xf32>
    %112 = arith.mulf %109, %96 : vector<8x32xf32>
    %113 = arith.mulf %108, %110 : vector<8x32xf32>
    %114 = arith.addf %112, %113 : vector<8x32xf32>
    %115 = math.tanh %114 : vector<8x32xf32>
    %116 = arith.mulf %111, %115 : vector<8x32xf32>
    %117 = vector.extract_strided_slice %5 {offsets = [48, 0], sizes = [8, 128], strides = [1, 1]} : vector<64x128xf32> to vector<8x128xf32>
    %cst_23 = arith.constant dense<0.000000e+00> : vector<8x128xf32>
    %118 = tpu.matmul %116, %6, %cst_23 {dimension_numbers = #tpu.dot_dimension_numbers<[1], [0], [0], [1], [0, 0, 1, 1], [], []>} : vector<8x32xf32>, vector<32x128xf32>, vector<8x128xf32> -> vector<8x128xf32>
    %119 = arith.addf %117, %118 : vector<8x128xf32>
    %120 = arith.negf %119 : vector<8x128xf32>
    %121 = math.exp %120 : vector<8x128xf32>
    %cst_24 = arith.constant 1.000000e+00 : f32
    %122 = vector.broadcast %cst_24 : f32 to vector<8x128xf32>
    %123 = arith.addf %122, %121 : vector<8x128xf32>
    %124 = arith.divf %122, %123 : vector<8x128xf32>
    %125 = math.tanh %119 : vector<8x128xf32>
    %126 = vector.extract_strided_slice %124 {offsets = [0, 0], sizes = [8, 32], strides = [1, 1]} : vector<8x128xf32> to vector<8x32xf32>
    %127 = vector.extract_strided_slice %124 {offsets = [0, 32], sizes = [8, 32], strides = [1, 1]} : vector<8x128xf32> to vector<8x32xf32>
    %128 = vector.extract_strided_slice %125 {offsets = [0, 64], sizes = [8, 32], strides = [1, 1]} : vector<8x128xf32> to vector<8x32xf32>
    %129 = vector.extract_strided_slice %124 {offsets = [0, 96], sizes = [8, 32], strides = [1, 1]} : vector<8x128xf32> to vector<8x32xf32>
    %130 = arith.mulf %127, %114 : vector<8x32xf32>
    %131 = arith.mulf %126, %128 : vector<8x32xf32>
    %132 = arith.addf %130, %131 : vector<8x32xf32>
    %133 = math.tanh %132 : vector<8x32xf32>
    %134 = arith.mulf %129, %133 : vector<8x32xf32>
    %135 = vector.extract_strided_slice %5 {offsets = [56, 0], sizes = [8, 128], strides = [1, 1]} : vector<64x128xf32> to vector<8x128xf32>
    %cst_25 = arith.constant dense<0.000000e+00> : vector<8x128xf32>
    %136 = tpu.matmul %134, %6, %cst_25 {dimension_numbers = #tpu.dot_dimension_numbers<[1], [0], [0], [1], [0, 0, 1, 1], [], []>} : vector<8x32xf32>, vector<32x128xf32>, vector<8x128xf32> -> vector<8x128xf32>
    %137 = arith.addf %135, %136 : vector<8x128xf32>
    %138 = arith.negf %137 : vector<8x128xf32>
    %139 = math.exp %138 : vector<8x128xf32>
    %cst_26 = arith.constant 1.000000e+00 : f32
    %140 = vector.broadcast %cst_26 : f32 to vector<8x128xf32>
    %141 = arith.addf %140, %139 : vector<8x128xf32>
    %142 = arith.divf %140, %141 : vector<8x128xf32>
    %143 = math.tanh %137 : vector<8x128xf32>
    %144 = vector.extract_strided_slice %142 {offsets = [0, 0], sizes = [8, 32], strides = [1, 1]} : vector<8x128xf32> to vector<8x32xf32>
    %145 = vector.extract_strided_slice %142 {offsets = [0, 32], sizes = [8, 32], strides = [1, 1]} : vector<8x128xf32> to vector<8x32xf32>
    %146 = vector.extract_strided_slice %143 {offsets = [0, 64], sizes = [8, 32], strides = [1, 1]} : vector<8x128xf32> to vector<8x32xf32>
    %147 = vector.extract_strided_slice %142 {offsets = [0, 96], sizes = [8, 32], strides = [1, 1]} : vector<8x128xf32> to vector<8x32xf32>
    %148 = arith.mulf %145, %132 : vector<8x32xf32>
    %149 = arith.mulf %144, %146 : vector<8x32xf32>
    %150 = arith.addf %148, %149 : vector<8x32xf32>
    %151 = math.tanh %150 : vector<8x32xf32>
    %152 = arith.mulf %147, %151 : vector<8x32xf32>
    %c0_27 = arith.constant 0 : index
    %c0_28 = arith.constant 0 : index
    %153 = vector.load %arg10[%c0_27, %c0_28] : memref<8x32xf32, #tpu.memory_space<vmem>>, vector<8x32xf32>
    tpu.vector_store %arg10[%c0_27, %c0_28], %152 {strides = array<i32>} : memref<8x32xf32, #tpu.memory_space<vmem>>, vector<8x32xf32>,
    %c0_29 = arith.constant 0 : index
    %c0_30 = arith.constant 0 : index
    %154 = vector.load %arg11[%c0_29, %c0_30] : memref<8x32xf32, #tpu.memory_space<vmem>>, vector<8x32xf32>
    tpu.vector_store %arg11[%c0_29, %c0_30], %150 {strides = array<i32>} : memref<8x32xf32, #tpu.memory_space<vmem>>, vector<8x32xf32>,
    %155 = tpu.concatenate %26, %44, %62, %80, %98, %116, %134, %152 in 0 : vector<8x32xf32>, vector<8x32xf32>, vector<8x32xf32>, vector<8x32xf32>, vector<8x32xf32>, vector<8x32xf32>, vector<8x32xf32>, vector<8x32xf32> -> vector<64x32xf32>
    %c0_31 = arith.constant 0 : index
    %c0_32 = arith.constant 0 : index
    %156 = vector.load %arg7[%c0_31, %c0_32] : memref<32x16xf32, #tpu.memory_space<vmem>>, vector<32x16xf32>
    %cst_33 = arith.constant dense<0.000000e+00> : vector<64x16xf32>
    %157 = tpu.matmul %155, %156, %cst_33 {dimension_numbers = #tpu.dot_dimension_numbers<[1], [0], [0], [1], [0, 0, 1, 1], [], []>} : vector<64x32xf32>, vector<32x16xf32>, vector<64x16xf32> -> vector<64x16xf32>
    %c0_34 = arith.constant 0 : index
    %c0_35 = arith.constant 0 : index
    %158 = vector.load %arg8[%c0_34, %c0_35] : memref<1x16xf32, #tpu.memory_space<vmem>>, vector<1x16xf32>
    %159 = vector.broadcast %158 : vector<1x16xf32> to vector<64x16xf32>
    %160 = arith.addf %157, %159 : vector<64x16xf32>
    %c0_36 = arith.constant 0 : index
    %c0_37 = arith.constant 0 : index
    %161 = vector.load %arg9[%c0_36, %c0_37] : memref<64x16xf32, #tpu.memory_space<vmem>>, vector<64x16xf32>
    tpu.vector_store %arg9[%c0_36, %c0_37], %160 {strides = array<i32>} : memref<64x16xf32, #tpu.memory_space<vmem>>, vector<64x16xf32>,
    return
  }
  func.func @transform_0(%arg0: i32) -> (i32, i32) {
    %c0_i32 = arith.constant 0 : i32
    %c0_i32_0 = arith.constant 0 : i32
    %c0_i32_1 = arith.constant 0 : i32
    return %c0_i32, %c0_i32_0 : i32, i32
  }
  func.func @transform_1(%arg0: i32) -> (i32, i32) {
    %c0_i32 = arith.constant 0 : i32
    %c0_i32_0 = arith.constant 0 : i32
    %c0_i32_1 = arith.constant 0 : i32
    return %c0_i32, %c0_i32_0 : i32, i32
  }
  func.func @transform_2(%arg0: i32) -> (i32, i32) {
    %c0_i32 = arith.constant 0 : i32
    %c0_i32_0 = arith.constant 0 : i32
    %c0_i32_1 = arith.constant 0 : i32
    return %c0_i32, %c0_i32_0 : i32, i32
  }
  func.func @transform_3(%arg0: i32) -> (i32, i32) {
    %c0_i32 = arith.constant 0 : i32
    %c0_i32_0 = arith.constant 0 : i32
    %c0_i32_1 = arith.constant 0 : i32
    return %c0_i32, %c0_i32_0 : i32, i32
  }
  func.func @transform_4(%arg0: i32) -> (i32, i32) {
    %c0_i32 = arith.constant 0 : i32
    %c0_i32_0 = arith.constant 0 : i32
    %c0_i32_1 = arith.constant 0 : i32
    return %c0_i32, %c0_i32_0 : i32, i32
  }
  func.func @transform_5(%arg0: i32) -> (i32, i32) {
    %c0_i32 = arith.constant 0 : i32
    %c0_i32_0 = arith.constant 0 : i32
    %c0_i32_1 = arith.constant 0 : i32
    return %c0_i32, %c0_i32_0 : i32, i32
  }
  func.func @transform_6(%arg0: i32) -> (i32, i32) {
    %c0_i32 = arith.constant 0 : i32
    %c0_i32_0 = arith.constant 0 : i32
    %c0_i32_1 = arith.constant 0 : i32
    return %c0_i32, %c0_i32_0 : i32, i32
  }
  func.func @transform_7(%arg0: i32) -> (i32, i32) {
    %c0_i32 = arith.constant 0 : i32
    %c0_i32_0 = arith.constant 0 : i32
    %c0_i32_1 = arith.constant 0 : i32
    return %c0_i32, %c0_i32_0 : i32, i32
  }
  func.func @transform_8(%arg0: i32) -> (i32, i32) {
    %c0_i32 = arith.constant 0 : i32
    %c0_i32_0 = arith.constant 0 : i32
    %c0_i32_1 = arith.constant 0 : i32
    return %c0_i32, %c0_i32_0 : i32, i32
  }
  func.func @transform_9(%arg0: i32) -> (i32, i32) {
    %c0_i32 = arith.constant 0 : i32
    %c0_i32_0 = arith.constant 0 : i32
    %c0_i32_1 = arith.constant 0 : i32
    return %c0_i32, %c0_i32_0 : i32, i32
  }
  func.func @transform_10(%arg0: i32) -> (i32, i32) {
    %c0_i32 = arith.constant 0 : i32
    %c0_i32_0 = arith.constant 0 : i32
    %c0_i32_1 = arith.constant 0 : i32
    return %c0_i32, %c0_i32_0 : i32, i32
  }
}

</mosaic_0001>

<llo_original>
// kernel: tpu_custom_call.1
$region0: #{tpu_custom_call.1}
  #allocation0 [shape = 'u32[]', space=smem, size = 0x4, offset = 0x4, fixed_abs, tag = 'smem constant byte address 0x4 - core index']
  #allocation1 [shape = 'u32[144,128]{1,0:T(1,128)}', space=vmem, size = 0x12000, scoped, tag = 'internal scratch']
  %s0 = inlined_call_operand.vmem [shape: f32[64,16], index: 0, kind: input, shape index: {}]
  %s1 = inlined_call_operand.vmem [shape: f32[8,32], index: 1, kind: input, shape index: {}]
  %s2 = inlined_call_operand.vmem [shape: f32[8,32], index: 2, kind: input, shape index: {}]
  %s3 = inlined_call_operand.vmem [shape: f32[16,128], index: 3, kind: input, shape index: {}]
  %s4 = inlined_call_operand.vmem [shape: f32[32,128], index: 4, kind: input, shape index: {}]
  %s5 = inlined_call_operand.vmem [shape: f32[1,128], index: 5, kind: input, shape index: {}]
  %s6 = inlined_call_operand.vmem [shape: f32[32,16], index: 6, kind: input, shape index: {}]
  %s7 = inlined_call_operand.vmem [shape: f32[1,16], index: 7, kind: input, shape index: {}]
  %s8 = inlined_call_operand.vmem [shape: f32[64,16], index: 8, kind: output, shape index: {0}]
  %s9 = inlined_call_operand.hbm [shape: f32[8,32], index: 9, kind: output, shape index: {1}]
  %s10 = inlined_call_operand.hbm [shape: f32[8,32], index: 10, kind: output, shape index: {2}]
  %11 = xla_tuple %s8, %s9, %s10
  %s12 = sld [smem:[#allocation0]]
  $region58: #{tpu_custom_call.1} parent=0
    _
  %s14 = ssub.s32 1, %s12
  %s15 = scalar_select 0, %s14, %s12
  $region1: #{tpu_custom_call.1} parent=0
    #allocation2 [shape = 'u8[4096]{0}', space=vmem, size = 0x1000, scoped, tag = 'output window, operand 1, single buffered']
    #allocation3 [shape = 's32[1]{0}', space=sflag, size = 0x4, scoped, tag = 'scoped memory for tpu_custom_call.1']
    #allocation4 [shape = 'u8[4096]{0}', space=vmem, size = 0x1000, scoped, tag = 'output window, operand 2, single buffered']
    #allocation5 [shape = 's32[1]{0}', space=sflag, size = 0x4, scoped, tag = 'scoped memory for tpu_custom_call.1']
    %16 = vsyncpa [#allocation3], 0
    %17 = vsyncpa [#allocation5], 0
    // Predicated region
    $region2: #{tpu_custom_call.1} parent=1 // pred_check
      _
    $region3: #{tpu_custom_call.1} parent=1 // pred_check_branch
      %19 = sbr.rel (0) target = $region5
    $region4: #{tpu_custom_call.1} parent=1 // pred_region
      _
    $region5: #{tpu_custom_call.1} parent=1 // pred_fallthru
      _
    // Predicated region
    $region6: #{tpu_custom_call.1} parent=1 // pred_check
      _
    $region7: #{tpu_custom_call.1} parent=1 // pred_check_branch
      %21 = sbr.rel (0) target = $region9
    $region8: #{tpu_custom_call.1} parent=1 // pred_region
      _
    $region9: #{tpu_custom_call.1} parent=1 // pred_fallthru
      _
    // Predicated region
    $region10: #{tpu_custom_call.1} parent=1 // pred_check
      _
    $region11: #{tpu_custom_call.1} parent=1 // pred_check_branch
      %23 = sbr.rel (0) target = $region13
    $region12: #{tpu_custom_call.1} parent=1 // pred_region
      _
    $region13: #{tpu_custom_call.1} parent=1 // pred_fallthru
      _
    // Predicated region
    $region14: #{tpu_custom_call.1} parent=1 // pred_check
      _
    $region15: #{tpu_custom_call.1} parent=1 // pred_check_branch
      %25 = sbr.rel (0) target = $region17
    $region16: #{tpu_custom_call.1} parent=1 // pred_region
      _
    $region17: #{tpu_custom_call.1} parent=1 // pred_fallthru
      _
    // Predicated region
    $region18: #{tpu_custom_call.1} parent=1 // pred_check
      _
    $region19: #{tpu_custom_call.1} parent=1 // pred_check_branch
      %27 = sbr.rel (0) target = $region21
    $region20: #{tpu_custom_call.1} parent=1 // pred_region
      _
    $region21: #{tpu_custom_call.1} parent=1 // pred_fallthru
      _
    // Predicated region
    $region22: #{tpu_custom_call.1} parent=1 // pred_check
      _
    $region23: #{tpu_custom_call.1} parent=1 // pred_check_branch
      %29 = sbr.rel (0) target = $region25
    $region24: #{tpu_custom_call.1} parent=1 // pred_region
      _
    $region25: #{tpu_custom_call.1} parent=1 // pred_fallthru
      _
    // Predicated region
    $region26: #{tpu_custom_call.1} parent=1 // pred_check
      _
    $region27: #{tpu_custom_call.1} parent=1 // pred_check_branch
      %31 = sbr.rel (0) target = $region29
    $region28: #{tpu_custom_call.1} parent=1 // pred_region
      _
    $region29: #{tpu_custom_call.1} parent=1 // pred_fallthru
      _
    // Predicated region
    $region30: #{tpu_custom_call.1} parent=1 // pred_check
      _
    $region31: #{tpu_custom_call.1} parent=1 // pred_check_branch
      %33 = sbr.rel (0) target = $region33
    $region32: #{tpu_custom_call.1} parent=1 // pred_region
      _
    $region33: #{tpu_custom_call.1} parent=1 // pred_fallthru
      _
    %v34 = vld [vmem:[%s0] sm:$0xff]
    %v35 = vld [vmem:[%s0 + $0x8] sm:$0xff]
    %v36 = vld [vmem:[%s0 + $0x10] sm:$0xff]
    %v37 = vld [vmem:[%s0 + $0x18] sm:$0xff]
    %v38 = vld [vmem:[%s0 + $0x20] sm:$0xff]
    %v39 = vld [vmem:[%s0 + $0x28] sm:$0xff]
    %v40 = vld [vmem:[%s0 + $0x30] sm:$0xff]
    %v41 = vld [vmem:[%s0 + $0x38] sm:$0xff]
    %v42 = vld [vmem:[%s3] sm:$0xff]
    %v43 = vld [vmem:[%s3 + $0x8] sm:$0xff]
    %v44 = vld [vmem:[%s5] sm:$0x1]
    %v46 = vlaneseq
    %v47 = vshrl.u32 %v46, 7
    %v48 = vsub.s32 0, %v47
    %v49 = vrot.slane %v44, %v48
    %vm51 = vcmask 130048
    %v53 = vsel %vm51, %v34, 0
    %v56 = vsel %vm51, %v35, 0
    %v59 = vsel %vm51, %v36, 0
    %v62 = vsel %vm51, %v37, 0
    %v65 = vsel %vm51, %v38, 0
    %v68 = vsel %vm51, %v39, 0
    %v71 = vsel %vm51, %v40, 0
    %v74 = vsel %vm51, %v41, 0
    %76 = vmatprep.subr.mxu0 0.0
    %77 = vmatpush1.msra.mxu0 0.0
    %78 = vmatprep.subr.mxu0 0.0
    %79 = vmatpush1.msra.mxu0 0.0
    %80 = vmatprep.subr.mxu0 0.0
    %81 = vmatpush1.msra.mxu0 0.0
    %82 = vmatprep.subr.mxu0 0.0
    %83 = vmatpush1.msra.mxu0 0.0
    %84 = vmatprep.subr.mxu0 0.0
    %85 = vmatpush1.msra.mxu0 0.0
    %86 = vmatprep.subr.mxu0 0.0
    %87 = vmatpush1.msra.mxu0 0.0
    %88 = vmatprep.subr.mxu0 0.0
    %89 = vmatpush1.msra.mxu0 0.0
    %90 = vmatprep.subr.mxu0 0.0
    %91 = vmatpush1.msra.mxu0 0.0
    %92 = vmatprep.subr.mxu0 0.0
    %93 = vmatpush1.msra.mxu0 0.0
    %94 = vmatprep.subr.mxu0 0.0
    %95 = vmatpush1.msra.mxu0 0.0
    %96 = vmatprep.subr.mxu0 0.0
    %97 = vmatpush1.msra.mxu0 0.0
    %98 = vmatprep.subr.mxu0 0.0
    %99 = vmatpush1.msra.mxu0 0.0
    %100 = vmatprep.subr.mxu0 0.0
    %101 = vmatpush1.msra.mxu0 0.0
    %102 = vmatprep.subr.mxu0 0.0
    %103 = vmatpush1.msra.mxu0 0.0
    %104 = vmatprep.subr.mxu0 0.0
    %105 = vmatpush1.msra.mxu0 %v43
    %106 = vmatprep.subr.mxu0 0.0
    %107 = vmatpush1.msra.mxu0 %v42
    %108 = vmatprep.subr.mxu0 0.0
    %109 = vmatpush2.msra.mxu0 0.0
    %110 = vmatprep.subr.mxu0 0.0
    %111 = vmatpush2.msra.mxu0 0.0
    %112 = vmatprep.subr.mxu0 0.0
    %113 = vmatpush2.msra.mxu0 0.0
    %114 = vmatprep.subr.mxu0 0.0
    %115 = vmatpush2.msra.mxu0 0.0
    %116 = vmatprep.subr.mxu0 0.0
    %117 = vmatpush2.msra.mxu0 0.0
    %118 = vmatprep.subr.mxu0 0.0
    %119 = vmatpush2.msra.mxu0 0.0
    %120 = vmatprep.subr.mxu0 0.0
    %121 = vmatpush2.msra.mxu0 0.0
    %122 = vmatprep.subr.mxu0 0.0
    %123 = vmatpush2.msra.mxu0 0.0
    %124 = vmatprep.subr.mxu0 0.0
    %125 = vmatpush2.msra.mxu0 0.0
    %126 = vmatprep.subr.mxu0 0.0
    %127 = vmatpush2.msra.mxu0 0.0
    %128 = vmatprep.subr.mxu0 0.0
    %129 = vmatpush2.msra.mxu0 0.0
    %130 = vmatprep.subr.mxu0 0.0
    %131 = vmatpush2.msra.mxu0 0.0
    %132 = vmatprep.subr.mxu0 0.0
    %133 = vmatpush2.msra.mxu0 0.0
    %134 = vmatprep.subr.mxu0 0.0
    %135 = vmatpush2.msra.mxu0 0.0
    %136 = vmatprep.subr.mxu0 0.0
    %137 = vmatpush2.msra.mxu0 0.0
    %138 = vmatprep.subr.mxu0 0.0
    %139 = vmatpush2.msra.mxu0 0.0
    %140 = vmatprep.mubr.f32.mxu0 0.0
    %141 = vmatmul.mubr.f32.gmra.mxu0 %v53
    %v142 = vpop.f32.mrf.mxu0
    %v143 = vadd.f32 %v49, %v142
    %v144 = vpop.f32.mrf.mxu0
    %145 = vmatprep.mubr.f32.mxu0 0.0
    %146 = vmatmul.mubr.f32.gmra.mxu0 %v56
    %v147 = vpop.f32.mrf.mxu0
    %v148 = vadd.f32 %v49, %v147
    %v149 = vpop.f32.mrf.mxu0
    %150 = vmatprep.mubr.f32.mxu0 0.0
    %151 = vmatmul.mubr.f32.gmra.mxu0 %v59
    %v152 = vpop.f32.mrf.mxu0
    %v153 = vadd.f32 %v49, %v152
    %v154 = vpop.f32.mrf.mxu0
    %155 = vmatprep.mubr.f32.mxu0 0.0
    %156 = vmatmul.mubr.f32.gmra.mxu0 %v62
    %v157 = vpop.f32.mrf.mxu0
    %v158 = vadd.f32 %v49, %v157
    %v159 = vpop.f32.mrf.mxu0
    %160 = vmatprep.mubr.f32.mxu0 0.0
    %161 = vmatmul.mubr.f32.gmra.mxu0 %v65
    %v162 = vpop.f32.mrf.mxu0
    %v163 = vadd.f32 %v49, %v162
    %v164 = vpop.f32.mrf.mxu0
    %165 = vmatprep.mubr.f32.mxu0 0.0
    %166 = vmatmul.mubr.f32.gmra.mxu0 %v68
    %v167 = vpop.f32.mrf.mxu0
    %v168 = vadd.f32 %v49, %v167
    %v169 = vpop.f32.mrf.mxu0
    %170 = vmatprep.mubr.f32.mxu0 0.0
    %171 = vmatmul.mubr.f32.gmra.mxu0 %v71
    %v172 = vpop.f32.mrf.mxu0
    %v173 = vadd.f32 %v49, %v172
    %v174 = vpop.f32.mrf.mxu0
    %175 = vmatprep.mubr.f32.mxu0 0.0
    %176 = vmatmul.mubr.f32.gmra.mxu0 %v74
    %v177 = vpop.f32.mrf.mxu0
    %v178 = vadd.f32 %v49, %v177
    %v179 = vpop.f32.mrf.mxu0
    %180 = vdwg.mxu0
    %v181 = vld [vmem:[%s4] sm:$0xff]
    %v182 = vld [vmem:[%s4 + $0x8] sm:$0xff]
    %v183 = vld [vmem:[%s4 + $0x10] sm:$0xff]
    %v184 = vld [vmem:[%s4 + $0x18] sm:$0xff]
    %v185 = vld [vmem:[%s1] sm:$0xff]
    %v186 = vld [vmem:[%s2] sm:$0xff]
    %vm187 = vcmask 261120
    %v189 = vsel %vm187, %v185, 0
    %191 = vmatprep.subr.mxu0 0.0
    %192 = vmatpush1.msra.mxu0 0.0
    %193 = vmatprep.subr.mxu0 0.0
    %194 = vmatpush1.msra.mxu0 0.0
    %195 = vmatprep.subr.mxu0 0.0
    %196 = vmatpush1.msra.mxu0 0.0
    %197 = vmatprep.subr.mxu0 0.0
    %198 = vmatpush1.msra.mxu0 0.0
    %199 = vmatprep.subr.mxu0 0.0
    %200 = vmatpush1.msra.mxu0 0.0
    %201 = vmatprep.subr.mxu0 0.0
    %202 = vmatpush1.msra.mxu0 0.0
    %203 = vmatprep.subr.mxu0 0.0
    %204 = vmatpush1.msra.mxu0 0.0
    %205 = vmatprep.subr.mxu0 0.0
    %206 = vmatpush1.msra.mxu0 0.0
    %207 = vmatprep.subr.mxu0 0.0
    %208 = vmatpush1.msra.mxu0 0.0
    %209 = vmatprep.subr.mxu0 0.0
    %210 = vmatpush1.msra.mxu0 0.0
    %211 = vmatprep.subr.mxu0 0.0
    %212 = vmatpush1.msra.mxu0 0.0
    %213 = vmatprep.subr.mxu0 0.0
    %214 = vmatpush1.msra.mxu0 0.0
    %215 = vmatprep.subr.mxu0 0.0
    %216 = vmatpush1.msra.mxu0 %v184
    %217 = vmatprep.subr.mxu0 0.0
    %218 = vmatpush1.msra.mxu0 %v183
    %219 = vmatprep.subr.mxu0 0.0
    %220 = vmatpush1.msra.mxu0 %v182
    %221 = vmatprep.subr.mxu0 0.0
    %222 = vmatpush1.msra.mxu0 %v181
    %223 = vmatprep.subr.mxu0 0.0
    %224 = vmatpush2.msra.mxu0 0.0
    %225 = vmatprep.subr.mxu0 0.0
    %226 = vmatpush2.msra.mxu0 0.0
    %227 = vmatprep.subr.mxu0 0.0
    %228 = vmatpush2.msra.mxu0 0.0
    %229 = vmatprep.subr.mxu0 0.0
    %230 = vmatpush2.msra.mxu0 0.0
    %231 = vmatprep.subr.mxu0 0.0
    %232 = vmatpush2.msra.mxu0 0.0
    %233 = vmatprep.subr.mxu0 0.0
    %234 = vmatpush2.msra.mxu0 0.0
    %235 = vmatprep.subr.mxu0 0.0
    %236 = vmatpush2.msra.mxu0 0.0
    %237 = vmatprep.subr.mxu0 0.0
    %238 = vmatpush2.msra.mxu0 0.0
    %239 = vmatprep.subr.mxu0 0.0
    %240 = vmatpush2.msra.mxu0 0.0
    %241 = vmatprep.subr.mxu0 0.0
    %242 = vmatpush2.msra.mxu0 0.0
    %243 = vmatprep.subr.mxu0 0.0
    %244 = vmatpush2.msra.mxu0 0.0
    %245 = vmatprep.subr.mxu0 0.0
    %246 = vmatpush2.msra.mxu0 0.0
    %247 = vmatprep.subr.mxu0 0.0
    %248 = vmatpush2.msra.mxu0 0.0
    %249 = vmatprep.subr.mxu0 0.0
    %250 = vmatpush2.msra.mxu0 0.0
    %251 = vmatprep.subr.mxu0 0.0
    %252 = vmatpush2.msra.mxu0 0.0
    %253 = vmatprep.subr.mxu0 0.0
    %254 = vmatpush2.msra.mxu0 0.0
    %255 = vmatprep.mubr.f32.mxu0 0.0
    %256 = vmatmul.mubr.f32.gmra.mxu0 %v189
    %v257 = vpop.f32.mrf.mxu0
    %v258 = vadd.f32 0.0, %v257
    %v259 = vpop.f32.mrf.mxu0
    %260 = vdwg.mxu0
    %v261 = vadd.f32 %v143, %v258
    %v262 = vxor.u32 %v261, 2147483648
    %v263 = vmul.f32 %v262, 1.442695
    %v264 = vpow.pop %v263
    %v265 = vadd.f32 %v264, 1.0
    %v266 = vrcp.pop %v265
    %v267 = vmul.f32 1.0, %v266
    %v268 = vtanh.pop %v261
    %270 = vrot.lane.b32.xlu0 %v186, 32
    %v271 = vpop.permute.xlu0 %270
    %v273 = vmul.f32 %v267, %v271
    %275 = vrot.lane.b32.xlu0 %v268, 64
    %v276 = vpop.permute.xlu0 %275
    %v278 = vmul.f32 %v267, %v276
    %280 = vrot.lane.b32.xlu0 %v278, 32
    %v281 = vpop.permute.xlu0 %280
    %v283 = vadd.f32 %v273, %v281
    %v284 = vtanh.pop %v283
    %286 = vrot.lane.b32.xlu0 %v284, 64
    %v287 = vpop.permute.xlu0 %286
    %v289 = vmul.f32 %v267, %v287
    %291 = vrot.lane.b32.xlu0 %v289, 32
    %v292 = vpop.permute.xlu0 %291
    %v293 = vsel %vm187, %v292, 0
    %295 = vmatprep.subr.mxu0 0.0
    %296 = vmatpush1.msra.mxu0 0.0
    %297 = vmatprep.subr.mxu0 0.0
    %298 = vmatpush1.msra.mxu0 0.0
    %299 = vmatprep.subr.mxu0 0.0
    %300 = vmatpush1.msra.mxu0 0.0
    %301 = vmatprep.subr.mxu0 0.0
    %302 = vmatpush1.msra.mxu0 0.0
    %303 = vmatprep.subr.mxu0 0.0
    %304 = vmatpush1.msra.mxu0 0.0
    %305 = vmatprep.subr.mxu0 0.0
    %306 = vmatpush1.msra.mxu0 0.0
    %307 = vmatprep.subr.mxu0 0.0
    %308 = vmatpush1.msra.mxu0 0.0
    %309 = vmatprep.subr.mxu0 0.0
    %310 = vmatpush1.msra.mxu0 0.0
    %311 = vmatprep.subr.mxu0 0.0
    %312 = vmatpush1.msra.mxu0 0.0
    %313 = vmatprep.subr.mxu0 0.0
    %314 = vmatpush1.msra.mxu0 0.0
    %315 = vmatprep.subr.mxu0 0.0
    %316 = vmatpush1.msra.mxu0 0.0
    %317 = vmatprep.subr.mxu0 0.0
    %318 = vmatpush1.msra.mxu0 0.0
    %319 = vmatprep.subr.mxu0 0.0
    %320 = vmatpush1.msra.mxu0 %v184
    %321 = vmatprep.subr.mxu0 0.0
    %322 = vmatpush1.msra.mxu0 %v183
    %323 = vmatprep.subr.mxu0 0.0
    %324 = vmatpush1.msra.mxu0 %v182
    %325 = vmatprep.subr.mxu0 0.0
    %326 = vmatpush1.msra.mxu0 %v181
    %327 = vmatprep.subr.mxu0 0.0
    %328 = vmatpush2.msra.mxu0 0.0
    %329 = vmatprep.subr.mxu0 0.0
    %330 = vmatpush2.msra.mxu0 0.0
    %331 = vmatprep.subr.mxu0 0.0
    %332 = vmatpush2.msra.mxu0 0.0
    %333 = vmatprep.subr.mxu0 0.0
    %334 = vmatpush2.msra.mxu0 0.0
    %335 = vmatprep.subr.mxu0 0.0
    %336 = vmatpush2.msra.mxu0 0.0
    %337 = vmatprep.subr.mxu0 0.0
    %338 = vmatpush2.msra.mxu0 0.0
    %339 = vmatprep.subr.mxu0 0.0
    %340 = vmatpush2.msra.mxu0 0.0
    %341 = vmatprep.subr.mxu0 0.0
    %342 = vmatpush2.msra.mxu0 0.0
    %343 = vmatprep.subr.mxu0 0.0
    %344 = vmatpush2.msra.mxu0 0.0
    %345 = vmatprep.subr.mxu0 0.0
    %346 = vmatpush2.msra.mxu0 0.0
    %347 = vmatprep.subr.mxu0 0.0
    %348 = vmatpush2.msra.mxu0 0.0
    %349 = vmatprep.subr.mxu0 0.0
    %350 = vmatpush2.msra.mxu0 0.0
    %351 = vmatprep.subr.mxu0 0.0
    %352 = vmatpush2.msra.mxu0 0.0
    %353 = vmatprep.subr.mxu0 0.0
    %354 = vmatpush2.msra.mxu0 0.0
    %355 = vmatprep.subr.mxu0 0.0
    %356 = vmatpush2.msra.mxu0 0.0
    %357 = vmatprep.subr.mxu0 0.0
    %358 = vmatpush2.msra.mxu0 0.0
    %359 = vmatprep.mubr.f32.mxu0 0.0
    %360 = vmatmul.mubr.f32.gmra.mxu0 %v293
    %v361 = vpop.f32.mrf.mxu0
    %v362 = vadd.f32 0.0, %v361
    %v363 = vpop.f32.mrf.mxu0
    %364 = vdwg.mxu0
    %v365 = vadd.f32 %v148, %v362
    %v366 = vxor.u32 %v365, 2147483648
    %v367 = vmul.f32 %v366, 1.442695
    %v368 = vpow.pop %v367
    %v369 = vadd.f32 %v368, 1.0
    %v370 = vrcp.pop %v369
    %v371 = vmul.f32 1.0, %v370
    %v372 = vtanh.pop %v365
    %v373 = vmul.f32 %v371, %v283
    %375 = vrot.lane.b32.xlu0 %v372, 64
    %v376 = vpop.permute.xlu0 %375
    %v378 = vmul.f32 %v371, %v376
    %380 = vrot.lane.b32.xlu0 %v378, 32
    %v381 = vpop.permute.xlu0 %380
    %v383 = vadd.f32 %v373, %v381
    %v384 = vtanh.pop %v383
    %386 = vrot.lane.b32.xlu0 %v384, 64
    %v387 = vpop.permute.xlu0 %386
    %v389 = vmul.f32 %v371, %v387
    %391 = vrot.lane.b32.xlu0 %v389, 32
    %v392 = vpop.permute.xlu0 %391
    %v393 = vsel %vm187, %v392, 0
    %395 = vmatprep.subr.mxu0 0.0
    %396 = vmatpush1.msra.mxu0 0.0
    %397 = vmatprep.subr.mxu0 0.0
    %398 = vmatpush1.msra.mxu0 0.0
    %399 = vmatprep.subr.mxu0 0.0
    %400 = vmatpush1.msra.mxu0 0.0
    %401 = vmatprep.subr.mxu0 0.0
    %402 = vmatpush1.msra.mxu0 0.0
    %403 = vmatprep.subr.mxu0 0.0
    %404 = vmatpush1.msra.mxu0 0.0
    %405 = vmatprep.subr.mxu0 0.0
    %406 = vmatpush1.msra.mxu0 0.0
    %407 = vmatprep.subr.mxu0 0.0
    %408 = vmatpush1.msra.mxu0 0.0
    %409 = vmatprep.subr.mxu0 0.0
    %410 = vmatpush1.msra.mxu0 0.0
    %411 = vmatprep.subr.mxu0 0.0
    %412 = vmatpush1.msra.mxu0 0.0
    %413 = vmatprep.subr.mxu0 0.0
    %414 = vmatpush1.msra.mxu0 0.0
    %415 = vmatprep.subr.mxu0 0.0
    %416 = vmatpush1.msra.mxu0 0.0
    %417 = vmatprep.subr.mxu0 0.0
    %418 = vmatpush1.msra.mxu0 0.0
    %419 = vmatprep.subr.mxu0 0.0
    %420 = vmatpush1.msra.mxu0 %v184
    %421 = vmatprep.subr.mxu0 0.0
    %422 = vmatpush1.msra.mxu0 %v183
    %423 = vmatprep.subr.mxu0 0.0
    %424 = vmatpush1.msra.mxu0 %v182
    %425 = vmatprep.subr.mxu0 0.0
    %426 = vmatpush1.msra.mxu0 %v181
    %427 = vmatprep.subr.mxu0 0.0
    %428 = vmatpush2.msra.mxu0 0.0
    %429 = vmatprep.subr.mxu0 0.0
    %430 = vmatpush2.msra.mxu0 0.0
    %431 = vmatprep.subr.mxu0 0.0
    %432 = vmatpush2.msra.mxu0 0.0
    %433 = vmatprep.subr.mxu0 0.0
    %434 = vmatpush2.msra.mxu0 0.0
    %435 = vmatprep.subr.mxu0 0.0
    %436 = vmatpush2.msra.mxu0 0.0
    %437 = vmatprep.subr.mxu0 0.0
    %438 = vmatpush2.msra.mxu0 0.0
    %439 = vmatprep.subr.mxu0 0.0
    %440 = vmatpush2.msra.mxu0 0.0
    %441 = vmatprep.subr.mxu0 0.0
    %442 = vmatpush2.msra.mxu0 0.0
    %443 = vmatprep.subr.mxu0 0.0
    %444 = vmatpush2.msra.mxu0 0.0
    %445 = vmatprep.subr.mxu0 0.0
    %446 = vmatpush2.msra.mxu0 0.0
    %447 = vmatprep.subr.mxu0 0.0
    %448 = vmatpush2.msra.mxu0 0.0
    %449 = vmatprep.subr.mxu0 0.0
    %450 = vmatpush2.msra.mxu0 0.0
    %451 = vmatprep.subr.mxu0 0.0
    %452 = vmatpush2.msra.mxu0 0.0
    %453 = vmatprep.subr.mxu0 0.0
    %454 = vmatpush2.msra.mxu0 0.0
    %455 = vmatprep.subr.mxu0 0.0
    %456 = vmatpush2.msra.mxu0 0.0
    %457 = vmatprep.subr.mxu0 0.0
    %458 = vmatpush2.msra.mxu0 0.0
    %459 = vmatprep.mubr.f32.mxu0 0.0
    %460 = vmatmul.mubr.f32.gmra.mxu0 %v393
    %v461 = vpop.f32.mrf.mxu0
    %v462 = vadd.f32 0.0, %v461
    %v463 = vpop.f32.mrf.mxu0
    %464 = vdwg.mxu0
    %v465 = vadd.f32 %v153, %v462
    %v466 = vxor.u32 %v465, 2147483648
    %v467 = vmul.f32 %v466, 1.442695
    %v468 = vpow.pop %v467
    %v469 = vadd.f32 %v468, 1.0
    %v470 = vrcp.pop %v469
    %v471 = vmul.f32 1.0, %v470
    %v472 = vtanh.pop %v465
    %v473 = vmul.f32 %v471, %v383
    %475 = vrot.lane.b32.xlu0 %v472, 64
    %v476 = vpop.permute.xlu0 %475
    %v478 = vmul.f32 %v471, %v476
    %480 = vrot.lane.b32.xlu0 %v478, 32
    %v481 = vpop.permute.xlu0 %480
    %v483 = vadd.f32 %v473, %v481
    %v484 = vtanh.pop %v483
    %486 = vrot.lane.b32.xlu0 %v484, 64
    %v487 = vpop.permute.xlu0 %486
    %v489 = vmul.f32 %v471, %v487
    %491 = vrot.lane.b32.xlu0 %v489, 32
    %v492 = vpop.permute.xlu0 %491
    %v493 = vsel %vm187, %v492, 0
    %495 = vmatprep.subr.mxu0 0.0
    %496 = vmatpush1.msra.mxu0 0.0
    %497 = vmatprep.subr.mxu0 0.0
    %498 = vmatpush1.msra.mxu0 0.0
    %499 = vmatprep.subr.mxu0 0.0
    %500 = vmatpush1.msra.mxu0 0.0
    %501 = vmatprep.subr.mxu0 0.0
    %502 = vmatpush1.msra.mxu0 0.0
    %503 = vmatprep.subr.mxu0 0.0
    %504 = vmatpush1.msra.mxu0 0.0
    %505 = vmatprep.subr.mxu0 0.0
    %506 = vmatpush1.msra.mxu0 0.0
    %507 = vmatprep.subr.mxu0 0.0
    %508 = vmatpush1.msra.mxu0 0.0
    %509 = vmatprep.subr.mxu0 0.0
    %510 = vmatpush1.msra.mxu0 0.0
    %511 = vmatprep.subr.mxu0 0.0
    %512 = vmatpush1.msra.mxu0 0.0
    %513 = vmatprep.subr.mxu0 0.0
    %514 = vmatpush1.msra.mxu0 0.0
    %515 = vmatprep.subr.mxu0 0.0
    %516 = vmatpush1.msra.mxu0 0.0
    %517 = vmatprep.subr.mxu0 0.0
    %518 = vmatpush1.msra.mxu0 0.0
    %519 = vmatprep.subr.mxu0 0.0
    %520 = vmatpush1.msra.mxu0 %v184
    %521 = vmatprep.subr.mxu0 0.0
    %522 = vmatpush1.msra.mxu0 %v183
    %523 = vmatprep.subr.mxu0 0.0
    %524 = vmatpush1.msra.mxu0 %v182
    %525 = vmatprep.subr.mxu0 0.0
    %526 = vmatpush1.msra.mxu0 %v181
    %527 = vmatprep.subr.mxu0 0.0
    %528 = vmatpush2.msra.mxu0 0.0
    %529 = vmatprep.subr.mxu0 0.0
    %530 = vmatpush2.msra.mxu0 0.0
    %531 = vmatprep.subr.mxu0 0.0
    %532 = vmatpush2.msra.mxu0 0.0
    %533 = vmatprep.subr.mxu0 0.0
    %534 = vmatpush2.msra.mxu0 0.0
    %535 = vmatprep.subr.mxu0 0.0
    %536 = vmatpush2.msra.mxu0 0.0
    %537 = vmatprep.subr.mxu0 0.0
    %538 = vmatpush2.msra.mxu0 0.0
    %539 = vmatprep.subr.mxu0 0.0
    %540 = vmatpush2.msra.mxu0 0.0
    %541 = vmatprep.subr.mxu0 0.0
    %542 = vmatpush2.msra.mxu0 0.0
    %543 = vmatprep.subr.mxu0 0.0
    %544 = vmatpush2.msra.mxu0 0.0
    %545 = vmatprep.subr.mxu0 0.0
    %546 = vmatpush2.msra.mxu0 0.0
    %547 = vmatprep.subr.mxu0 0.0
    %548 = vmatpush2.msra.mxu0 0.0
    %549 = vmatprep.subr.mxu0 0.0
    %550 = vmatpush2.msra.mxu0 0.0
    %551 = vmatprep.subr.mxu0 0.0
    %552 = vmatpush2.msra.mxu0 0.0
    %553 = vmatprep.subr.mxu0 0.0
    %554 = vmatpush2.msra.mxu0 0.0
    %555 = vmatprep.subr.mxu0 0.0
    %556 = vmatpush2.msra.mxu0 0.0
    %557 = vmatprep.subr.mxu0 0.0
    %558 = vmatpush2.msra.mxu0 0.0
    %559 = vmatprep.mubr.f32.mxu0 0.0
    %560 = vmatmul.mubr.f32.gmra.mxu0 %v493
    %v561 = vpop.f32.mrf.mxu0
    %v562 = vadd.f32 0.0, %v561
    %v563 = vpop.f32.mrf.mxu0
    %564 = vdwg.mxu0
    %v565 = vadd.f32 %v158, %v562
    %v566 = vxor.u32 %v565, 2147483648
    %v567 = vmul.f32 %v566, 1.442695
    %v568 = vpow.pop %v567
    %v569 = vadd.f32 %v568, 1.0
    %v570 = vrcp.pop %v569
    %v571 = vmul.f32 1.0, %v570
    %v572 = vtanh.pop %v565
    %v573 = vmul.f32 %v571, %v483
    %575 = vrot.lane.b32.xlu0 %v572, 64
    %v576 = vpop.permute.xlu0 %575
    %v578 = vmul.f32 %v571, %v576
    %580 = vrot.lane.b32.xlu0 %v578, 32
    %v581 = vpop.permute.xlu0 %580
    %v583 = vadd.f32 %v573, %v581
    %v584 = vtanh.pop %v583
    %586 = vrot.lane.b32.xlu0 %v584, 64
    %v587 = vpop.permute.xlu0 %586
    %v589 = vmul.f32 %v571, %v587
    %591 = vrot.lane.b32.xlu0 %v589, 32
    %v592 = vpop.permute.xlu0 %591
    %v593 = vsel %vm187, %v592, 0
    %595 = vmatprep.subr.mxu0 0.0
    %596 = vmatpush1.msra.mxu0 0.0
    %597 = vmatprep.subr.mxu0 0.0
    %598 = vmatpush1.msra.mxu0 0.0
    %599 = vmatprep.subr.mxu0 0.0
    %600 = vmatpush1.msra.mxu0 0.0
    %601 = vmatprep.subr.mxu0 0.0
    %602 = vmatpush1.msra.mxu0 0.0
    %603 = vmatprep.subr.mxu0 0.0
    %604 = vmatpush1.msra.mxu0 0.0
    %605 = vmatprep.subr.mxu0 0.0
    %606 = vmatpush1.msra.mxu0 0.0
    %607 = vmatprep.subr.mxu0 0.0
    %608 = vmatpush1.msra.mxu0 0.0
    %609 = vmatprep.subr.mxu0 0.0
    %610 = vmatpush1.msra.mxu0 0.0
    %611 = vmatprep.subr.mxu0 0.0
    %612 = vmatpush1.msra.mxu0 0.0
    %613 = vmatprep.subr.mxu0 0.0
    %614 = vmatpush1.msra.mxu0 0.0
    %615 = vmatprep.subr.mxu0 0.0
    %616 = vmatpush1.msra.mxu0 0.0
    %617 = vmatprep.subr.mxu0 0.0
    %618 = vmatpush1.msra.mxu0 0.0
    %619 = vmatprep.subr.mxu0 0.0
    %620 = vmatpush1.msra.mxu0 %v184
    %621 = vmatprep.subr.mxu0 0.0
    %622 = vmatpush1.msra.mxu0 %v183
    %623 = vmatprep.subr.mxu0 0.0
    %624 = vmatpush1.msra.mxu0 %v182
    %625 = vmatprep.subr.mxu0 0.0
    %626 = vmatpush1.msra.mxu0 %v181
    %627 = vmatprep.subr.mxu0 0.0
    %628 = vmatpush2.msra.mxu0 0.0
    %629 = vmatprep.subr.mxu0 0.0
    %630 = vmatpush2.msra.mxu0 0.0
    %631 = vmatprep.subr.mxu0 0.0
    %632 = vmatpush2.msra.mxu0 0.0
    %633 = vmatprep.subr.mxu0 0.0
    %634 = vmatpush2.msra.mxu0 0.0
    %635 = vmatprep.subr.mxu0 0.0
    %636 = vmatpush2.msra.mxu0 0.0
    %637 = vmatprep.subr.mxu0 0.0
    %638 = vmatpush2.msra.mxu0 0.0
    %639 = vmatprep.subr.mxu0 0.0
    %640 = vmatpush2.msra.mxu0 0.0
    %641 = vmatprep.subr.mxu0 0.0
    %642 = vmatpush2.msra.mxu0 0.0
    %643 = vmatprep.subr.mxu0 0.0
    %644 = vmatpush2.msra.mxu0 0.0
    %645 = vmatprep.subr.mxu0 0.0
    %646 = vmatpush2.msra.mxu0 0.0
    %647 = vmatprep.subr.mxu0 0.0
    %648 = vmatpush2.msra.mxu0 0.0
    %649 = vmatprep.subr.mxu0 0.0
    %650 = vmatpush2.msra.mxu0 0.0
    %651 = vmatprep.subr.mxu0 0.0
    %652 = vmatpush2.msra.mxu0 0.0
    %653 = vmatprep.subr.mxu0 0.0
    %654 = vmatpush2.msra.mxu0 0.0
    %655 = vmatprep.subr.mxu0 0.0
    %656 = vmatpush2.msra.mxu0 0.0
    %657 = vmatprep.subr.mxu0 0.0
    %658 = vmatpush2.msra.mxu0 0.0
    %659 = vmatprep.mubr.f32.mxu0 0.0
    %660 = vmatmul.mubr.f32.gmra.mxu0 %v593
    %v661 = vpop.f32.mrf.mxu0
    %v662 = vadd.f32 0.0, %v661
    %v663 = vpop.f32.mrf.mxu0
    %664 = vdwg.mxu0
    %v665 = vadd.f32 %v163, %v662
    %v666 = vxor.u32 %v665, 2147483648
    %v667 = vmul.f32 %v666, 1.442695
    %v668 = vpow.pop %v667
    %v669 = vadd.f32 %v668, 1.0
    %v670 = vrcp.pop %v669
    %v671 = vmul.f32 1.0, %v670
    %v672 = vtanh.pop %v665
    %v673 = vmul.f32 %v671, %v583
    %675 = vrot.lane.b32.xlu0 %v672, 64
    %v676 = vpop.permute.xlu0 %675
    %v678 = vmul.f32 %v671, %v676
    %680 = vrot.lane.b32.xlu0 %v678, 32
    %v681 = vpop.permute.xlu0 %680
    %v683 = vadd.f32 %v673, %v681
    %v684 = vtanh.pop %v683
    %686 = vrot.lane.b32.xlu0 %v684, 64
    %v687 = vpop.permute.xlu0 %686
    %v689 = vmul.f32 %v671, %v687
    %691 = vrot.lane.b32.xlu0 %v689, 32
    %v692 = vpop.permute.xlu0 %691
    %v693 = vsel %vm187, %v692, 0
    %695 = vmatprep.subr.mxu0 0.0
    %696 = vmatpush1.msra.mxu0 0.0
    %697 = vmatprep.subr.mxu0 0.0
    %698 = vmatpush1.msra.mxu0 0.0
    %699 = vmatprep.subr.mxu0 0.0
    %700 = vmatpush1.msra.mxu0 0.0
    %701 = vmatprep.subr.mxu0 0.0
    %702 = vmatpush1.msra.mxu0 0.0
    %703 = vmatprep.subr.mxu0 0.0
    %704 = vmatpush1.msra.mxu0 0.0
    %705 = vmatprep.subr.mxu0 0.0
    %706 = vmatpush1.msra.mxu0 0.0
    %707 = vmatprep.subr.mxu0 0.0
    %708 = vmatpush1.msra.mxu0 0.0
    %709 = vmatprep.subr.mxu0 0.0
    %710 = vmatpush1.msra.mxu0 0.0
    %711 = vmatprep.subr.mxu0 0.0
    %712 = vmatpush1.msra.mxu0 0.0
    %713 = vmatprep.subr.mxu0 0.0
    %714 = vmatpush1.msra.mxu0 0.0
    %715 = vmatprep.subr.mxu0 0.0
    %716 = vmatpush1.msra.mxu0 0.0
    %717 = vmatprep.subr.mxu0 0.0
    %718 = vmatpush1.msra.mxu0 0.0
    %719 = vmatprep.subr.mxu0 0.0
    %720 = vmatpush1.msra.mxu0 %v184
    %721 = vmatprep.subr.mxu0 0.0
    %722 = vmatpush1.msra.mxu0 %v183
    %723 = vmatprep.subr.mxu0 0.0
    %724 = vmatpush1.msra.mxu0 %v182
    %725 = vmatprep.subr.mxu0 0.0
    %726 = vmatpush1.msra.mxu0 %v181
    %727 = vmatprep.subr.mxu0 0.0
    %728 = vmatpush2.msra.mxu0 0.0
    %729 = vmatprep.subr.mxu0 0.0
    %730 = vmatpush2.msra.mxu0 0.0
    %731 = vmatprep.subr.mxu0 0.0
    %732 = vmatpush2.msra.mxu0 0.0
    %733 = vmatprep.subr.mxu0 0.0
    %734 = vmatpush2.msra.mxu0 0.0
    %735 = vmatprep.subr.mxu0 0.0
    %736 = vmatpush2.msra.mxu0 0.0
    %737 = vmatprep.subr.mxu0 0.0
    %738 = vmatpush2.msra.mxu0 0.0
    %739 = vmatprep.subr.mxu0 0.0
    %740 = vmatpush2.msra.mxu0 0.0
    %741 = vmatprep.subr.mxu0 0.0
    %742 = vmatpush2.msra.mxu0 0.0
    %743 = vmatprep.subr.mxu0 0.0
    %744 = vmatpush2.msra.mxu0 0.0
    %745 = vmatprep.subr.mxu0 0.0
    %746 = vmatpush2.msra.mxu0 0.0
    %747 = vmatprep.subr.mxu0 0.0
    %748 = vmatpush2.msra.mxu0 0.0
    %749 = vmatprep.subr.mxu0 0.0
    %750 = vmatpush2.msra.mxu0 0.0
    %751 = vmatprep.subr.mxu0 0.0
    %752 = vmatpush2.msra.mxu0 0.0
    %753 = vmatprep.subr.mxu0 0.0
    %754 = vmatpush2.msra.mxu0 0.0
    %755 = vmatprep.subr.mxu0 0.0
    %756 = vmatpush2.msra.mxu0 0.0
    %757 = vmatprep.subr.mxu0 0.0
    %758 = vmatpush2.msra.mxu0 0.0
    %759 = vmatprep.mubr.f32.mxu0 0.0
    %760 = vmatmul.mubr.f32.gmra.mxu0 %v693
    %v761 = vpop.f32.mrf.mxu0
    %v762 = vadd.f32 0.0, %v761
    %v763 = vpop.f32.mrf.mxu0
    %764 = vdwg.mxu0
    %v765 = vadd.f32 %v168, %v762
    %v766 = vxor.u32 %v765, 2147483648
    %v767 = vmul.f32 %v766, 1.442695
    %v768 = vpow.pop %v767
    %v769 = vadd.f32 %v768, 1.0
    %v770 = vrcp.pop %v769
    %v771 = vmul.f32 1.0, %v770
    %v772 = vtanh.pop %v765
    %v773 = vmul.f32 %v771, %v683
    %775 = vrot.lane.b32.xlu0 %v772, 64
    %v776 = vpop.permute.xlu0 %775
    %v778 = vmul.f32 %v771, %v776
    %780 = vrot.lane.b32.xlu0 %v778, 32
    %v781 = vpop.permute.xlu0 %780
    %v783 = vadd.f32 %v773, %v781
    %v784 = vtanh.pop %v783
    %786 = vrot.lane.b32.xlu0 %v784, 64
    %v787 = vpop.permute.xlu0 %786
    %v789 = vmul.f32 %v771, %v787
    %791 = vrot.lane.b32.xlu0 %v789, 32
    %v792 = vpop.permute.xlu0 %791
    %v793 = vsel %vm187, %v792, 0
    %795 = vmatprep.subr.mxu0 0.0
    %796 = vmatpush1.msra.mxu0 0.0
    %797 = vmatprep.subr.mxu0 0.0
    %798 = vmatpush1.msra.mxu0 0.0
    %799 = vmatprep.subr.mxu0 0.0
    %800 = vmatpush1.msra.mxu0 0.0
    %801 = vmatprep.subr.mxu0 0.0
    %802 = vmatpush1.msra.mxu0 0.0
    %803 = vmatprep.subr.mxu0 0.0
    %804 = vmatpush1.msra.mxu0 0.0
    %805 = vmatprep.subr.mxu0 0.0
    %806 = vmatpush1.msra.mxu0 0.0
    %807 = vmatprep.subr.mxu0 0.0
    %808 = vmatpush1.msra.mxu0 0.0
    %809 = vmatprep.subr.mxu0 0.0
    %810 = vmatpush1.msra.mxu0 0.0
    %811 = vmatprep.subr.mxu0 0.0
    %812 = vmatpush1.msra.mxu0 0.0
    %813 = vmatprep.subr.mxu0 0.0
    %814 = vmatpush1.msra.mxu0 0.0
    %815 = vmatprep.subr.mxu0 0.0
    %816 = vmatpush1.msra.mxu0 0.0
    %817 = vmatprep.subr.mxu0 0.0
    %818 = vmatpush1.msra.mxu0 0.0
    %819 = vmatprep.subr.mxu0 0.0
    %820 = vmatpush1.msra.mxu0 %v184
    %821 = vmatprep.subr.mxu0 0.0
    %822 = vmatpush1.msra.mxu0 %v183
    %823 = vmatprep.subr.mxu0 0.0
    %824 = vmatpush1.msra.mxu0 %v182
    %825 = vmatprep.subr.mxu0 0.0
    %826 = vmatpush1.msra.mxu0 %v181
    %827 = vmatprep.subr.mxu0 0.0
    %828 = vmatpush2.msra.mxu0 0.0
    %829 = vmatprep.subr.mxu0 0.0
    %830 = vmatpush2.msra.mxu0 0.0
    %831 = vmatprep.subr.mxu0 0.0
    %832 = vmatpush2.msra.mxu0 0.0
    %833 = vmatprep.subr.mxu0 0.0
    %834 = vmatpush2.msra.mxu0 0.0
    %835 = vmatprep.subr.mxu0 0.0
    %836 = vmatpush2.msra.mxu0 0.0
    %837 = vmatprep.subr.mxu0 0.0
    %838 = vmatpush2.msra.mxu0 0.0
    %839 = vmatprep.subr.mxu0 0.0
    %840 = vmatpush2.msra.mxu0 0.0
    %841 = vmatprep.subr.mxu0 0.0
    %842 = vmatpush2.msra.mxu0 0.0
    %843 = vmatprep.subr.mxu0 0.0
    %844 = vmatpush2.msra.mxu0 0.0
    %845 = vmatprep.subr.mxu0 0.0
    %846 = vmatpush2.msra.mxu0 0.0
    %847 = vmatprep.subr.mxu0 0.0
    %848 = vmatpush2.msra.mxu0 0.0
    %849 = vmatprep.subr.mxu0 0.0
    %850 = vmatpush2.msra.mxu0 0.0
    %851 = vmatprep.subr.mxu0 0.0
    %852 = vmatpush2.msra.mxu0 0.0
    %853 = vmatprep.subr.mxu0 0.0
    %854 = vmatpush2.msra.mxu0 0.0
    %855 = vmatprep.subr.mxu0 0.0
    %856 = vmatpush2.msra.mxu0 0.0
    %857 = vmatprep.subr.mxu0 0.0
    %858 = vmatpush2.msra.mxu0 0.0
    %859 = vmatprep.mubr.f32.mxu0 0.0
    %860 = vmatmul.mubr.f32.gmra.mxu0 %v793
    %v861 = vpop.f32.mrf.mxu0
    %v862 = vadd.f32 0.0, %v861
    %v863 = vpop.f32.mrf.mxu0
    %864 = vdwg.mxu0
    %v865 = vadd.f32 %v173, %v862
    %v866 = vxor.u32 %v865, 2147483648
    %v867 = vmul.f32 %v866, 1.442695
    %v868 = vpow.pop %v867
    %v869 = vadd.f32 %v868, 1.0
    %v870 = vrcp.pop %v869
    %v871 = vmul.f32 1.0, %v870
    %v872 = vtanh.pop %v865
    %v873 = vmul.f32 %v871, %v783
    %875 = vrot.lane.b32.xlu0 %v872, 64
    %v876 = vpop.permute.xlu0 %875
    %v878 = vmul.f32 %v871, %v876
    %880 = vrot.lane.b32.xlu0 %v878, 32
    %v881 = vpop.permute.xlu0 %880
    %v883 = vadd.f32 %v873, %v881
    %v884 = vtanh.pop %v883
    %886 = vrot.lane.b32.xlu0 %v884, 64
    %v887 = vpop.permute.xlu0 %886
    %v889 = vmul.f32 %v871, %v887
    %891 = vrot.lane.b32.xlu0 %v889, 32
    %v892 = vpop.permute.xlu0 %891
    %v893 = vsel %vm187, %v892, 0
    %895 = vmatprep.subr.mxu0 0.0
    %896 = vmatpush1.msra.mxu0 0.0
    %897 = vmatprep.subr.mxu0 0.0
    %898 = vmatpush1.msra.mxu0 0.0
    %899 = vmatprep.subr.mxu0 0.0
    %900 = vmatpush1.msra.mxu0 0.0
    %901 = vmatprep.subr.mxu0 0.0
    %902 = vmatpush1.msra.mxu0 0.0
    %903 = vmatprep.subr.mxu0 0.0
    %904 = vmatpush1.msra.mxu0 0.0
    %905 = vmatprep.subr.mxu0 0.0
    %906 = vmatpush1.msra.mxu0 0.0
    %907 = vmatprep.subr.mxu0 0.0
    %908 = vmatpush1.msra.mxu0 0.0
    %909 = vmatprep.subr.mxu0 0.0
    %910 = vmatpush1.msra.mxu0 0.0
    %911 = vmatprep.subr.mxu0 0.0
    %912 = vmatpush1.msra.mxu0 0.0
    %913 = vmatprep.subr.mxu0 0.0
    %914 = vmatpush1.msra.mxu0 0.0
    %915 = vmatprep.subr.mxu0 0.0
    %916 = vmatpush1.msra.mxu0 0.0
    %917 = vmatprep.subr.mxu0 0.0
    %918 = vmatpush1.msra.mxu0 0.0
    %919 = vmatprep.subr.mxu0 0.0
    %920 = vmatpush1.msra.mxu0 %v184
    %921 = vmatprep.subr.mxu0 0.0
    %922 = vmatpush1.msra.mxu0 %v183
    %923 = vmatprep.subr.mxu0 0.0
    %924 = vmatpush1.msra.mxu0 %v182
    %925 = vmatprep.subr.mxu0 0.0
    %926 = vmatpush1.msra.mxu0 %v181
    %927 = vmatprep.subr.mxu0 0.0
    %928 = vmatpush2.msra.mxu0 0.0
    %929 = vmatprep.subr.mxu0 0.0
    %930 = vmatpush2.msra.mxu0 0.0
    %931 = vmatprep.subr.mxu0 0.0
    %932 = vmatpush2.msra.mxu0 0.0
    %933 = vmatprep.subr.mxu0 0.0
    %934 = vmatpush2.msra.mxu0 0.0
    %935 = vmatprep.subr.mxu0 0.0
    %936 = vmatpush2.msra.mxu0 0.0
    %937 = vmatprep.subr.mxu0 0.0
    %938 = vmatpush2.msra.mxu0 0.0
    %939 = vmatprep.subr.mxu0 0.0
    %940 = vmatpush2.msra.mxu0 0.0
    %941 = vmatprep.subr.mxu0 0.0
    %942 = vmatpush2.msra.mxu0 0.0
    %943 = vmatprep.subr.mxu0 0.0
    %944 = vmatpush2.msra.mxu0 0.0
    %945 = vmatprep.subr.mxu0 0.0
    %946 = vmatpush2.msra.mxu0 0.0
    %947 = vmatprep.subr.mxu0 0.0
    %948 = vmatpush2.msra.mxu0 0.0
    %949 = vmatprep.subr.mxu0 0.0
    %950 = vmatpush2.msra.mxu0 0.0
    %951 = vmatprep.subr.mxu0 0.0
    %952 = vmatpush2.msra.mxu0 0.0
    %953 = vmatprep.subr.mxu0 0.0
    %954 = vmatpush2.msra.mxu0 0.0
    %955 = vmatprep.subr.mxu0 0.0
    %956 = vmatpush2.msra.mxu0 0.0
    %957 = vmatprep.subr.mxu0 0.0
    %958 = vmatpush2.msra.mxu0 0.0
    %959 = vmatprep.mubr.f32.mxu0 0.0
    %960 = vmatmul.mubr.f32.gmra.mxu0 %v893
    %v961 = vpop.f32.mrf.mxu0
    %v962 = vadd.f32 0.0, %v961
    %v963 = vpop.f32.mrf.mxu0
    %964 = vdwg.mxu0
    %v965 = vadd.f32 %v178, %v962
    %v966 = vxor.u32 %v965, 2147483648
    %v967 = vmul.f32 %v966, 1.442695
    %v968 = vpow.pop %v967
    %v969 = vadd.f32 %v968, 1.0
    %v970 = vrcp.pop %v969
    %v971 = vmul.f32 1.0, %v970
    %v972 = vtanh.pop %v965
    %v973 = vmul.f32 %v971, %v883
    %975 = vrot.lane.b32.xlu0 %v972, 64
    %v976 = vpop.permute.xlu0 %975
    %v978 = vmul.f32 %v971, %v976
    %980 = vrot.lane.b32.xlu0 %v978, 32
    %v981 = vpop.permute.xlu0 %980
    %v983 = vadd.f32 %v973, %v981
    %v984 = vtanh.pop %v983
    %986 = vrot.lane.b32.xlu0 %v984, 64
    %v987 = vpop.permute.xlu0 %986
    %v989 = vmul.f32 %v971, %v987
    %991 = vrot.lane.b32.xlu0 %v989, 32
    %v992 = vpop.permute.xlu0 %991
    %994 = vst.msk [vmem:[#allocation2] sm:$0xff] %vm187, %v992
    %996 = vrot.lane.b32.xlu0 %v983, 96
    %v997 = vpop.permute.xlu0 %996
    %999 = vst.msk [vmem:[#allocation4] sm:$0xff] %vm187, %v997
    %v1000 = vld [vmem:[%s6] sm:$0xff]
    %v1001 = vld [vmem:[%s6 + $0x8] sm:$0xff]
    %v1002 = vld [vmem:[%s6 + $0x10] sm:$0xff]
    %v1003 = vld [vmem:[%s6 + $0x18] sm:$0xff]
    %v1004 = vld [vmem:[%s7] sm:$0x1]
    %v1006 = vlaneseq
    %v1007 = vshrl.u32 %v1006, 7
    %v1008 = vsub.s32 0, %v1007
    %v1009 = vrot.slane %v1004, %v1008
    %v1011 = vsel %vm187, %v992, 0
    %1013 = vmatprep.subr.mxu0 0.0
    %1014 = vmatpush1.msra.mxu0 0.0
    %1015 = vmatprep.subr.mxu0 0.0
    %1016 = vmatpush1.msra.mxu0 0.0
    %1017 = vmatprep.subr.mxu0 0.0
    %1018 = vmatpush1.msra.mxu0 0.0
    %1019 = vmatprep.subr.mxu0 0.0
    %1020 = vmatpush1.msra.mxu0 0.0
    %1021 = vmatprep.subr.mxu0 0.0
    %1022 = vmatpush1.msra.mxu0 0.0
    %1023 = vmatprep.subr.mxu0 0.0
    %1024 = vmatpush1.msra.mxu0 0.0
    %1025 = vmatprep.subr.mxu0 0.0
    %1026 = vmatpush1.msra.mxu0 0.0
    %1027 = vmatprep.subr.mxu0 0.0
    %1028 = vmatpush1.msra.mxu0 0.0
    %1029 = vmatprep.subr.mxu0 0.0
    %1030 = vmatpush1.msra.mxu0 0.0
    %1031 = vmatprep.subr.mxu0 0.0
    %1032 = vmatpush1.msra.mxu0 0.0
    %1033 = vmatprep.subr.mxu0 0.0
    %1034 = vmatpush1.msra.mxu0 0.0
    %1035 = vmatprep.subr.mxu0 0.0
    %1036 = vmatpush1.msra.mxu0 0.0
    %1037 = vmatprep.subr.mxu0 0.0
    %1038 = vmatpush1.msra.mxu0 %v1003
    %1039 = vmatprep.subr.mxu0 0.0
    %1040 = vmatpush1.msra.mxu0 %v1002
    %1041 = vmatprep.subr.mxu0 0.0
    %1042 = vmatpush1.msra.mxu0 %v1001
    %1043 = vmatprep.subr.mxu0 0.0
    %1044 = vmatpush1.msra.mxu0 %v1000
    %1045 = vmatprep.subr.mxu0 0.0
    %1046 = vmatpush2.msra.mxu0 0.0
    %1047 = vmatprep.subr.mxu0 0.0
    %1048 = vmatpush2.msra.mxu0 0.0
    %1049 = vmatprep.subr.mxu0 0.0
    %1050 = vmatpush2.msra.mxu0 0.0
    %1051 = vmatprep.subr.mxu0 0.0
    %1052 = vmatpush2.msra.mxu0 0.0
    %1053 = vmatprep.subr.mxu0 0.0
    %1054 = vmatpush2.msra.mxu0 0.0
    %1055 = vmatprep.subr.mxu0 0.0
    %1056 = vmatpush2.msra.mxu0 0.0
    %1057 = vmatprep.subr.mxu0 0.0
    %1058 = vmatpush2.msra.mxu0 0.0
    %1059 = vmatprep.subr.mxu0 0.0
    %1060 = vmatpush2.msra.mxu0 0.0
    %1061 = vmatprep.subr.mxu0 0.0
    %1062 = vmatpush2.msra.mxu0 0.0
    %1063 = vmatprep.subr.mxu0 0.0
    %1064 = vmatpush2.msra.mxu0 0.0
    %1065 = vmatprep.subr.mxu0 0.0
    %1066 = vmatpush2.msra.mxu0 0.0
    %1067 = vmatprep.subr.mxu0 0.0
    %1068 = vmatpush2.msra.mxu0 0.0
    %1069 = vmatprep.subr.mxu0 0.0
    %1070 = vmatpush2.msra.mxu0 0.0
    %1071 = vmatprep.subr.mxu0 0.0
    %1072 = vmatpush2.msra.mxu0 0.0
    %1073 = vmatprep.subr.mxu0 0.0
    %1074 = vmatpush2.msra.mxu0 0.0
    %1075 = vmatprep.subr.mxu0 0.0
    %1076 = vmatpush2.msra.mxu0 0.0
    %1077 = vmatprep.mubr.f32.mxu0 0.0
    %1078 = vmatmul.mubr.f32.gmra.mxu0 %v293
    %v1079 = vpop.f32.mrf.mxu0
    %v1080 = vadd.f32 %v1009, %v1079
    %v1081 = vpop.f32.mrf.mxu0
    %1082 = vmatprep.mubr.f32.mxu0 0.0
    %1083 = vmatmul.mubr.f32.gmra.mxu0 %v393
    %v1084 = vpop.f32.mrf.mxu0
    %v1085 = vadd.f32 %v1009, %v1084
    %v1086 = vpop.f32.mrf.mxu0
    %1087 = vmatprep.mubr.f32.mxu0 0.0
    %1088 = vmatmul.mubr.f32.gmra.mxu0 %v493
    %v1089 = vpop.f32.mrf.mxu0
    %v1090 = vadd.f32 %v1009, %v1089
    %v1091 = vpop.f32.mrf.mxu0
    %1092 = vmatprep.mubr.f32.mxu0 0.0
    %1093 = vmatmul.mubr.f32.gmra.mxu0 %v593
    %v1094 = vpop.f32.mrf.mxu0
    %v1095 = vadd.f32 %v1009, %v1094
    %v1096 = vpop.f32.mrf.mxu0
    %1097 = vmatprep.mubr.f32.mxu0 0.0
    %1098 = vmatmul.mubr.f32.gmra.mxu0 %v693
    %v1099 = vpop.f32.mrf.mxu0
    %v1100 = vadd.f32 %v1009, %v1099
    %v1101 = vpop.f32.mrf.mxu0
    %1102 = vmatprep.mubr.f32.mxu0 0.0
    %1103 = vmatmul.mubr.f32.gmra.mxu0 %v793
    %v1104 = vpop.f32.mrf.mxu0
    %v1105 = vadd.f32 %v1009, %v1104
    %v1106 = vpop.f32.mrf.mxu0
    %1107 = vmatprep.mubr.f32.mxu0 0.0
    %1108 = vmatmul.mubr.f32.gmra.mxu0 %v893
    %v1109 = vpop.f32.mrf.mxu0
    %v1110 = vadd.f32 %v1009, %v1109
    %v1111 = vpop.f32.mrf.mxu0
    %1112 = vmatprep.mubr.f32.mxu0 0.0
    %1113 = vmatmul.mubr.f32.gmra.mxu0 %v1011
    %v1114 = vpop.f32.mrf.mxu0
    %v1115 = vadd.f32 %v1009, %v1114
    %v1116 = vpop.f32.mrf.mxu0
    %1117 = vdwg.mxu0
    %1118 = vst.msk [vmem:[%s8] sm:$0xff] %vm51, %v1080
    %1119 = vst.msk [vmem:[%s8 + $0x8] sm:$0xff] %vm51, %v1085
    %1120 = vst.msk [vmem:[%s8 + $0x10] sm:$0xff] %vm51, %v1090
    %1121 = vst.msk [vmem:[%s8 + $0x18] sm:$0xff] %vm51, %v1095
    %1122 = vst.msk [vmem:[%s8 + $0x20] sm:$0xff] %vm51, %v1100
    %1123 = vst.msk [vmem:[%s8 + $0x28] sm:$0xff] %vm51, %v1105
    %1124 = vst.msk [vmem:[%s8 + $0x30] sm:$0xff] %vm51, %v1110
    %1125 = vst.msk [vmem:[%s8 + $0x38] sm:$0xff] %vm51, %v1115
    // Predicated region
    $region34: #{tpu_custom_call.1} parent=1 // pred_check
      _
    $region35: #{tpu_custom_call.1} parent=1 // pred_check_branch
      %1127 = sbr.rel (0) target = $region37
    $region36: #{tpu_custom_call.1} parent=1 // pred_region
      _
    $region37: #{tpu_custom_call.1} parent=1 // pred_fallthru
      _
    // Predicated region
    $region38: #{tpu_custom_call.1} parent=1 // pred_check
      _
    $region39: #{tpu_custom_call.1} parent=1 // pred_check_branch
      %1129 = sbr.rel (0) target = $region41
    $region40: #{tpu_custom_call.1} parent=1 // pred_region
      %s1131 = ssub.s32 128, 128
      %1132 = vsyncadd [#allocation3], %s1131
      %s1134 = sshll.u32 [#allocation2], 4
      %s1135 = int_to_ptr.vmem [resolvable:$true] %s1134
      %1137 = dma.vmem_to_hbm [thread:$0]  %s1135, 128, %s9, [#allocation3]
    $region41: #{tpu_custom_call.1} parent=1 // pred_fallthru
      _
    // Predicated region
    $region42: #{tpu_custom_call.1} parent=1 // pred_check
      _
    $region43: #{tpu_custom_call.1} parent=1 // pred_check_branch
      %1139 = sbr.rel (0) target = $region45
    $region44: #{tpu_custom_call.1} parent=1 // pred_region
      %s1141 = ssub.s32 128, 128
      %1142 = vsyncadd [#allocation5], %s1141
      %s1144 = sshll.u32 [#allocation4], 4
      %s1145 = int_to_ptr.vmem [resolvable:$true] %s1144
      %1147 = dma.vmem_to_hbm [thread:$0]  %s1145, 128, %s10, [#allocation5]
    $region45: #{tpu_custom_call.1} parent=1 // pred_fallthru
      _
    // Predicated region
    $region46: #{tpu_custom_call.1} parent=1 // pred_check
      _
    $region47: #{tpu_custom_call.1} parent=1 // pred_check_branch
      %1149 = sbr.rel (0) target = $region49
    $region48: #{tpu_custom_call.1} parent=1 // pred_region
      _
    $region49: #{tpu_custom_call.1} parent=1 // pred_fallthru
      _
    // Predicated region
    $region50: #{tpu_custom_call.1} parent=1 // pred_check
      _
    $region51: #{tpu_custom_call.1} parent=1 // pred_check_branch
      %1151 = sbr.rel (0) target = $region53
    $region52: #{tpu_custom_call.1} parent=1 // pred_region
      %1152 = dma.done [#allocation3], 128
    $region53: #{tpu_custom_call.1} parent=1 // pred_fallthru
      _
    // Predicated region
    $region54: #{tpu_custom_call.1} parent=1 // pred_check
      _
    $region55: #{tpu_custom_call.1} parent=1 // pred_check_branch
      %1154 = sbr.rel (0) target = $region57
    $region56: #{tpu_custom_call.1} parent=1 // pred_region
      %1155 = dma.done [#allocation5], 128
    $region57: #{tpu_custom_call.1} parent=1 // pred_fallthru
      _
    %1156 = vsyncpa [#allocation3], 1
    %1157 = vsyncpa [#allocation5], 1

</llo_original>
